<compile_context>
chip_gen: v7x
topology: tpu7x:2x2x1
jax: 0.10.0
libtpu: 0.0.40
codegen_flags: <defaults>
</compile_context>

<pallas_src>
import functools

import jax
import jax.numpy as jnp
from jax.experimental import pallas as pl
from jax.experimental.pallas import tpu as pltpu


def _rev_lstm_kernel(x_ref, h0_ref, c0_ref, wih_ref, whh_ref, b_ref,
                     out_ref, cT_ref, h_scr, c_scr, gx_scr,
                     *, t_real, needs_mask, chunk_proj):
    g = pl.program_id(1)                       # time-chunk index (inner axis)
    nblk = pl.num_programs(1)
    Tc, Bt, I = x_ref.shape
    H = h_scr.shape[-1]

    # ---- (1) time-parallel input projection for the whole chunk -------------
    # One (Tc*Bt, I) x (I, 4H) MXU matmul; fills MXU cycles that are otherwise
    # idle while the serial recurrence waits, and avoids any gates_x HBM
    # round-trip.  (Fallback: per-timestep projection when Bt is not a
    # multiple of 8 so the merge-reshape would force a sublane relayout.)
    if chunk_proj:
        x_flat = x_ref[...].reshape(Tc * Bt, I)
        gx = jnp.dot(x_flat, wih_ref[...], preferred_element_type=jnp.float32)
        gx_scr[...] = gx.reshape(Tc, Bt, 4 * H) + b_ref[...]

    # ---- (2) carry init at the first (highest-t) chunk of each batch block --
    @pl.when(g == 0)
    def _():
        h_scr[...] = h0_ref[...]
        c_scr[...] = c0_ref[...]

    chunk_start = (nblk - 1 - g) * Tc          # original t of this chunk's row 0

    # ---- (3) serial recurrence over the chunk (reversed order inside) -------
    def step(i, carry):
        h_prev, c_prev = carry
        tt = Tc - 1 - i
        if chunk_proj:
            gx_t = gx_scr[tt]
        else:
            gx_t = jnp.dot(x_ref[tt], wih_ref[...],
                           preferred_element_type=jnp.float32) + b_ref[...]
        # W_hh stays in VMEM and is loaded inside the loop (3 vld slots/cycle);
        # hoisting it to a value would spill vregs across the unrolled body.
        # TODO(synk): weight-stationary MXU driving (pltpu.matmul_push_rhs /
        # matmul_acc_lhs / matmul_pop) would avoid re-pushing W_hh every step.
        gates = gx_t + jnp.dot(h_prev, whh_ref[...],
                               preferred_element_type=jnp.float32)
        # Gate columns reordered in the wrapper to [i, f, o | g]: one
        # contiguous sigmoid slab + one tanh slab.  sigmoid(x) ==
        # 0.5*tanh(0.5*x) + 0.5 -> a single EUP push per element.
        s = 0.5 * jnp.tanh(0.5 * gates[:, : 3 * H]) + 0.5
        g_gate = jnp.tanh(gates[:, 3 * H:])
        i_gate = s[:, 0:H]
        f_gate = s[:, H:2 * H]
        o_gate = s[:, 2 * H:3 * H]
        c_new = f_gate * c_prev + i_gate * g_gate
        h_new = o_gate * jnp.tanh(c_new)
        if needs_mask:                         # static flag: only if T was padded
            valid = (chunk_start + tt) < t_real
            h_new = jnp.where(valid, h_new, h_prev)
            c_new = jnp.where(valid, c_new, c_prev)
        out_ref[tt] = h_new                    # stored at the original time index
        return (h_new, c_new)

    h_fin, c_fin = jax.lax.fori_loop(
        0, Tc, step, (h_scr[...], c_scr[...]), unroll=True)

    # Persist the carry for the next chunk (earlier timesteps).
    h_scr[...] = h_fin
    c_scr[...] = c_fin

    # Only the last time chunk produces the final cell state.  (Final hidden
    # state == outputs[0] for a reverse scan; recovered in the wrapper.)
    @pl.when(g == nblk - 1)
    def _():
        cT_ref[...] = c_fin


def _pick_chunk(T, Bt, I, H, *, max_chunk, budget_bytes):
    """Largest Tc <= max_chunk whose VMEM footprint (double-buffered x/out
    streams + gx scratch + weights + carries) fits under budget_bytes."""
    G = 4 * H
    fixed = 4 * (I * G + H * G + G + 6 * Bt * H)       # weights + bias + carries + h0/c0
    best = 1
    for tc in range(1, max(1, min(T, max_chunk)) + 1):
        per = 4 * tc * Bt * (2 * I + 2 * H + G)        # 2x-buffered x/out + gx scratch
        if fixed + per <= budget_bytes:
            best = tc
    return best


def _reorder_gate_rows(w, H):
    """Permute gate rows from torch order [i, f, g, o] to [i, f, o, g] so the
    three sigmoid gates form one contiguous slab in the kernel."""
    return jnp.concatenate([w[: 2 * H], w[3 * H: 4 * H], w[2 * H: 3 * H]], axis=0)


def reverse_lstm_layer(x, h0, c0, w_ih, w_hh, b_ih, b_hh, *,
                       max_chunk=32, num_batch_blocks=1,
                       vmem_budget_bytes=40 << 20):
    """x: (T, B, I); h0/c0: (B, H); w_ih: (4H, I); w_hh: (4H, H); biases (4H,).
    Returns (outputs (T, B, H), (h_T, c_T)) matching ReverseLSTMLayer.forward."""
    T, B, I = x.shape
    H = h0.shape[-1]
    G = 4 * H
    assert T >= 1, "reverse scan needs T >= 1 (h_T == outputs[0])"
    assert B % num_batch_blocks == 0
    nbb = num_batch_blocks
    Bt = B // nbb

    f32 = jnp.float32
    # TODO(synk): for production, stream x / W_hh / outputs in bf16 (keep the
    # f32 matmul accumulator and f32 cell state); kept f32 here for the 1e-5
    # correctness check at demo sizes.
    x32 = x.astype(f32)

    # Reorder gate rows [i,f,g,o] -> [i,f,o,g] and pre-transpose so kernel
    # matmuls are plain (rows, K) x (K, 4H) on the MXU.
    w_ih_t = _reorder_gate_rows(jnp.asarray(w_ih, f32), H).T          # (I, 4H)
    w_hh_t = _reorder_gate_rows(jnp.asarray(w_hh, f32), H).T          # (H, 4H)
    b2d = _reorder_gate_rows(jnp.asarray(b_ih + b_hh, f32), H).reshape(1, G)

    # Chunk size from a VMEM budget (safe on v7x's 64 MiB; raise the budget on
    # v5e/v6e's 128 MiB to grow Tc and amortize per-grid-step overhead more).
    Tc = _pick_chunk(T, Bt, I, H, max_chunk=max_chunk,
                     budget_bytes=vmem_budget_bytes)
    nblk = pl.cdiv(T, Tc)
    Tp = nblk * Tc
    if Tp != T:                                # masked, padded tail chunk
        x32 = jnp.concatenate([x32, jnp.zeros((Tp - T, B, I), f32)], axis=0)

    chunk_proj = (Bt % 8 == 0)                 # clean sublane merge for reshape
    kernel = functools.partial(_rev_lstm_kernel, t_real=T,
                               needs_mask=(Tp != T), chunk_proj=chunk_proj)

    out_shapes = (
        jax.ShapeDtypeStruct((Tp, B, H), f32),         # stacked outputs (padded)
        jax.ShapeDtypeStruct((B, H), f32),             # final cell state
    )

    # grid = (batch blocks [parallel, outer], reversed time chunks [arbitrary]).
    x_spec = pl.BlockSpec((Tc, Bt, I), lambda bb, g: (nblk - 1 - g, bb, 0))
    out_spec = pl.BlockSpec((Tc, Bt, H), lambda bb, g: (nblk - 1 - g, bb, 0))
    bh_spec = pl.BlockSpec((Bt, H), lambda bb, g: (bb, 0))
    wih_spec = pl.BlockSpec((I, G), lambda bb, g: (0, 0))
    whh_spec = pl.BlockSpec((H, G), lambda bb, g: (0, 0))
    b_spec = pl.BlockSpec((1, G), lambda bb, g: (0, 0))

    vmem_needed = (4 * (I * G + H * G + G + 6 * Bt * H)
                   + 4 * Tc * Bt * (2 * I + 2 * H + G))
    vmem_limit = int(min(max(vmem_needed + (8 << 20), 32 << 20), 48 << 20))

    cost = pl.CostEstimate(
        flops=2 * T * B * G * (I + H) + 10 * T * B * H,
        transcendentals=5 * T * B * H,
        bytes_accessed=4 * (T * B * I + T * B * H + I * G + H * G + G + 4 * B * H),
    )

    outs, cT = pl.pallas_call(
        kernel,
        out_shape=out_shapes,
        grid_spec=pltpu.PrefetchScalarGridSpec(
            num_scalar_prefetch=0,
            grid=(nbb, nblk),
            in_specs=[x_spec, bh_spec, bh_spec, wih_spec, whh_spec, b_spec],
            out_specs=[out_spec, bh_spec],
            scratch_shapes=[
                pltpu.VMEM((Bt, H), f32),              # h carry across chunks
                pltpu.VMEM((Bt, H), f32),              # c carry across chunks
                pltpu.VMEM((Tc, Bt, G), f32),          # per-chunk gates_x
            ],
        ),
        compiler_params=pltpu.CompilerParams(
            dimension_semantics=("parallel", "arbitrary"),
            vmem_limit_bytes=vmem_limit,
        ),
        cost_estimate=cost,
    )(x32, h0.astype(f32), c0.astype(f32), w_ih_t, w_hh_t, b2d)

    outs = outs[:T]
    hT = outs[0]        # reverse scan: final hidden state == output at t = 0
    return outs, (hT, cT)


def _reference(x, h0, c0, w_ih, w_hh, b_ih, b_hh):
    """Pure-JAX reference matching the PyTorch ReverseLSTMLayer semantics."""
    H = h0.shape[-1]

    def cell(carry, xt):
        h, c = carry
        gates = xt @ w_ih.T + b_ih + h @ w_hh.T + b_hh
        i_g = jax.nn.sigmoid(gates[:, 0 * H:1 * H])
        f_g = jax.nn.sigmoid(gates[:, 1 * H:2 * H])
        g_g = jnp.tanh(gates[:, 2 * H:3 * H])
        o_g = jax.nn.sigmoid(gates[:, 3 * H:4 * H])
        c_new = f_g * c + i_g * g_g
        h_new = o_g * jnp.tanh(c_new)
        return (h_new, c_new), h_new

    (hT, cT), ys = jax.lax.scan(cell, (h0, c0), x, reverse=True)
    return ys, (hT, cT)


def _make_inputs(key, T, B, I, H):
    ks = jax.random.split(key, 7)
    x = jax.random.normal(ks[0], (T, B, I), jnp.float32)
    h0 = jax.random.normal(ks[1], (B, H), jnp.float32)
    c0 = jax.random.normal(ks[2], (B, H), jnp.float32)
    w_ih = jax.random.normal(ks[3], (4 * H, I), jnp.float32) * 0.1
    w_hh = jax.random.normal(ks[4], (4 * H, H), jnp.float32) * 0.1
    b_ih = jax.random.normal(ks[5], (4 * H,), jnp.float32) * 0.1
    b_hh = jax.random.normal(ks[6], (4 * H,), jnp.float32) * 0.1
    return x, h0, c0, w_ih, w_hh, b_ih, b_hh


def _check(args, **kw):
    outs, (hT, cT) = reverse_lstm_layer(*args, **kw)
    jax.block_until_ready((outs, hT, cT))
    r_outs, (r_h, r_c) = _reference(*args)
    assert jnp.allclose(outs, r_outs, atol=1e-5, rtol=1e-5)
    assert jnp.allclose(hT, r_h, atol=1e-5, rtol=1e-5)
    assert jnp.allclose(cT, r_c, atol=1e-5, rtol=1e-5)


if __name__ == "__main__":
    key = jax.random.PRNGKey(0)
    k1, k2, k3 = jax.random.split(key, 3)

    # 1) Lane-dense H=128, divisible T, 4 time chunks -> exercises the
    #    cross-chunk VMEM carry and the fused chunk-level input projection.
    _check(_make_inputs(k1, 16, 8, 64, 128), max_chunk=4)

    # 2) Awkward T=13 (masked padded tail chunk) + 2 batch blocks -> exercises
    #    the tail mask and the batch-parallel ("megacore") grid axis.
    _check(_make_inputs(k2, 13, 16, 64, 128), max_chunk=4, num_batch_blocks=2)

    # 3) Tiny non-aligned shapes (B=4, H=32, I=16, T=5) -> exercises the
    #    per-timestep projection fallback (Bt not a multiple of 8) and masking.
    _check(_make_inputs(k3, 5, 4, 16, 32), max_chunk=3)

    print("KERNEL_OK")
</pallas_src>

<mosaic_0001>
module attributes {stable_mosaic.version = 11 : i64} {
  func.func @_rev_lstm_kernel(%arg0: i32, %arg1: i32, %arg2: memref<4x8x64xf32, #tpu.memory_space<vmem>>, %arg3: memref<8x128xf32, #tpu.memory_space<vmem>>, %arg4: memref<8x128xf32, #tpu.memory_space<vmem>>, %arg5: memref<64x512xf32, #tpu.memory_space<vmem>>, %arg6: memref<128x512xf32, #tpu.memory_space<vmem>>, %arg7: memref<1x512xf32, #tpu.memory_space<vmem>>, %arg8: memref<4x8x128xf32, #tpu.memory_space<vmem>>, %arg9: memref<8x128xf32, #tpu.memory_space<vmem>>, %arg10: memref<8x128xf32, #tpu.memory_space<vmem>>, %arg11: memref<8x128xf32, #tpu.memory_space<vmem>>, %arg12: memref<4x8x512xf32, #tpu.memory_space<vmem>>) attributes {dimension_semantics = [#tpu.dimension_semantics<parallel>, #tpu.dimension_semantics<arbitrary>], iteration_bounds = array<i64: 1, 4>, scalar_prefetch = 0 : i64, scratch_operands = 3 : i64, tpu.core_type = #tpu.core_type<tc>, window_params = [{transform_indices = @transform_0, window_bounds = array<i64: 4, 8, 64>}, {transform_indices = @transform_1, window_bounds = array<i64: 8, 128>}, {transform_indices = @transform_2, window_bounds = array<i64: 8, 128>}, {pipeline_mode = #tpu.pipeline_mode<synchronous>, transform_indices = @transform_3, window_bounds = array<i64: 64, 512>}, {pipeline_mode = #tpu.pipeline_mode<synchronous>, transform_indices = @transform_4, window_bounds = array<i64: 128, 512>}, {pipeline_mode = #tpu.pipeline_mode<synchronous>, transform_indices = @transform_5, window_bounds = array<i64: 1, 512>}, {transform_indices = @transform_6, window_bounds = array<i64: 4, 8, 128>}, {transform_indices = @transform_7, window_bounds = array<i64: 8, 128>}]} {
    %c0 = arith.constant 0 : index
    %c0_0 = arith.constant 0 : index
    %c0_1 = arith.constant 0 : index
    %0 = vector.load %arg2[%c0, %c0_0, %c0_1] : memref<4x8x64xf32, #tpu.memory_space<vmem>>, vector<4x8x64xf32>
    %1 = vector.shape_cast %0 : vector<4x8x64xf32> to vector<32x64xf32>
    %c0_2 = arith.constant 0 : index
    %c0_3 = arith.constant 0 : index
    %2 = vector.load %arg5[%c0_2, %c0_3] : memref<64x512xf32, #tpu.memory_space<vmem>>, vector<64x512xf32>
    %cst = arith.constant dense<0.000000e+00> : vector<32x512xf32>
    %3 = tpu.matmul %1, %2, %cst {dimension_numbers = #tpu.dot_dimension_numbers<[1], [0], [0], [1], [0, 0, 1, 1], [], []>} : vector<32x64xf32>, vector<64x512xf32>, vector<32x512xf32> -> vector<32x512xf32>
    %4 = vector.shape_cast %3 : vector<32x512xf32> to vector<4x8x512xf32>
    %c0_4 = arith.constant 0 : index
    %c0_5 = arith.constant 0 : index
    %5 = vector.load %arg7[%c0_4, %c0_5] : memref<1x512xf32, #tpu.memory_space<vmem>>, vector<1x512xf32>
    %6 = vector.shape_cast %5 : vector<1x512xf32> to vector<1x1x512xf32>
    %7 = vector.broadcast %6 : vector<1x1x512xf32> to vector<4x8x512xf32>
    %8 = arith.addf %4, %7 : vector<4x8x512xf32>
    %c0_6 = arith.constant 0 : index
    %c0_7 = arith.constant 0 : index
    %c0_8 = arith.constant 0 : index
    %9 = vector.load %arg12[%c0_6, %c0_7, %c0_8] : memref<4x8x512xf32, #tpu.memory_space<vmem>>, vector<4x8x512xf32>
    tpu.vector_store %arg12[%c0_6, %c0_7, %c0_8], %8 {strides = array<i32>} : memref<4x8x512xf32, #tpu.memory_space<vmem>>, vector<4x8x512xf32>,
    %c0_i32 = arith.constant 0 : i32
    %10 = arith.cmpi eq, %arg1, %c0_i32 : i32
    %11 = arith.extui %10 : i1 to i32
    %c0_i32_9 = arith.constant 0 : i32
    %12 = arith.cmpi ne, %11, %c0_i32_9 : i32
    scf.if %12 {
      %c0_65 = arith.constant 0 : index
      %c0_66 = arith.constant 0 : index
      %136 = vector.load %arg3[%c0_65, %c0_66] : memref<8x128xf32, #tpu.memory_space<vmem>>, vector<8x128xf32>
      %c0_67 = arith.constant 0 : index
      %c0_68 = arith.constant 0 : index
      %137 = vector.load %arg10[%c0_67, %c0_68] : memref<8x128xf32, #tpu.memory_space<vmem>>, vector<8x128xf32>
      tpu.vector_store %arg10[%c0_67, %c0_68], %136 {strides = array<i32>} : memref<8x128xf32, #tpu.memory_space<vmem>>, vector<8x128xf32>,
      %c0_69 = arith.constant 0 : index
      %c0_70 = arith.constant 0 : index
      %138 = vector.load %arg4[%c0_69, %c0_70] : memref<8x128xf32, #tpu.memory_space<vmem>>, vector<8x128xf32>
      %c0_71 = arith.constant 0 : index
      %c0_72 = arith.constant 0 : index
      %139 = vector.load %arg11[%c0_71, %c0_72] : memref<8x128xf32, #tpu.memory_space<vmem>>, vector<8x128xf32>
      tpu.vector_store %arg11[%c0_71, %c0_72], %138 {strides = array<i32>} : memref<8x128xf32, #tpu.memory_space<vmem>>, vector<8x128xf32>,
    } else {
    }
    %c0_10 = arith.constant 0 : index
    %c0_11 = arith.constant 0 : index
    %13 = vector.load %arg10[%c0_10, %c0_11] : memref<8x128xf32, #tpu.memory_space<vmem>>, vector<8x128xf32>
    %c0_12 = arith.constant 0 : index
    %c0_13 = arith.constant 0 : index
    %14 = vector.load %arg11[%c0_12, %c0_13] : memref<8x128xf32, #tpu.memory_space<vmem>>, vector<8x128xf32>
    %c0_i32_14 = arith.constant 0 : i32
    %c3_i32 = arith.constant 3 : i32
    %15 = arith.subi %c3_i32, %c0_i32_14 : i32
    %16 = arith.index_cast %15 : i32 to index
    %c0_15 = arith.constant 0 : index
    %c0_16 = arith.constant 0 : index
    %17 = vector.load %arg12[%16, %c0_15, %c0_16] : memref<4x8x512xf32, #tpu.memory_space<vmem>>, vector<1x8x512xf32>
    %18 = vector.shape_cast %17 : vector<1x8x512xf32> to vector<8x512xf32>
    %c0_17 = arith.constant 0 : index
    %c0_18 = arith.constant 0 : index
    %19 = vector.load %arg6[%c0_17, %c0_18] : memref<128x512xf32, #tpu.memory_space<vmem>>, vector<128x512xf32>
    %cst_19 = arith.constant dense<0.000000e+00> : vector<8x512xf32>
    %20 = tpu.matmul %13, %19, %cst_19 {dimension_numbers = #tpu.dot_dimension_numbers<[1], [0], [0], [1], [0, 0, 1, 1], [], []>} : vector<8x128xf32>, vector<128x512xf32>, vector<8x512xf32> -> vector<8x512xf32>
    %21 = arith.addf %18, %20 : vector<8x512xf32>
    %22 = vector.extract_strided_slice %21 {offsets = [0, 0], sizes = [8, 384], strides = [1, 1]} : vector<8x512xf32> to vector<8x384xf32>
    %cst_20 = arith.constant 5.000000e-01 : f32
    %23 = vector.broadcast %cst_20 : f32 to vector<8x384xf32>
    %24 = arith.mulf %23, %22 : vector<8x384xf32>
    %25 = math.tanh %24 : vector<8x384xf32>
    %cst_21 = arith.constant 5.000000e-01 : f32
    %26 = vector.broadcast %cst_21 : f32 to vector<8x384xf32>
    %27 = arith.mulf %26, %25 : vector<8x384xf32>
    %cst_22 = arith.constant 5.000000e-01 : f32
    %28 = vector.broadcast %cst_22 : f32 to vector<8x384xf32>
    %29 = arith.addf %27, %28 : vector<8x384xf32>
    %30 = vector.extract_strided_slice %21 {offsets = [0, 384], sizes = [8, 128], strides = [1, 1]} : vector<8x512xf32> to vector<8x128xf32>
    %31 = math.tanh %30 : vector<8x128xf32>
    %32 = vector.extract_strided_slice %29 {offsets = [0, 0], sizes = [8, 128], strides = [1, 1]} : vector<8x384xf32> to vector<8x128xf32>
    %33 = vector.extract_strided_slice %29 {offsets = [0, 128], sizes = [8, 128], strides = [1, 1]} : vector<8x384xf32> to vector<8x128xf32>
    %34 = vector.extract_strided_slice %29 {offsets = [0, 256], sizes = [8, 128], strides = [1, 1]} : vector<8x384xf32> to vector<8x128xf32>
    %35 = arith.mulf %33, %14 : vector<8x128xf32>
    %36 = arith.mulf %32, %31 : vector<8x128xf32>
    %37 = arith.addf %35, %36 : vector<8x128xf32>
    %38 = math.tanh %37 : vector<8x128xf32>
    %39 = arith.mulf %34, %38 : vector<8x128xf32>
    %40 = arith.index_cast %15 : i32 to index
    %c0_23 = arith.constant 0 : index
    %c0_24 = arith.constant 0 : index
    %41 = vector.load %arg8[%40, %c0_23, %c0_24] : memref<4x8x128xf32, #tpu.memory_space<vmem>>, vector<1x8x128xf32>
    %42 = vector.shape_cast %41 : vector<1x8x128xf32> to vector<8x128xf32>
    %43 = vector.shape_cast %39 : vector<8x128xf32> to vector<1x8x128xf32>
    tpu.vector_store %arg8[%40, %c0_23, %c0_24], %43 {strides = array<i32>} : memref<4x8x128xf32, #tpu.memory_space<vmem>>, vector<1x8x128xf32>,
    %c1_i32 = arith.constant 1 : i32
    %c3_i32_25 = arith.constant 3 : i32
    %44 = arith.subi %c3_i32_25, %c1_i32 : i32
    %45 = arith.index_cast %44 : i32 to index
    %c0_26 = arith.constant 0 : index
    %c0_27 = arith.constant 0 : index
    %46 = vector.load %arg12[%45, %c0_26, %c0_27] : memref<4x8x512xf32, #tpu.memory_space<vmem>>, vector<1x8x512xf32>
    %47 = vector.shape_cast %46 : vector<1x8x512xf32> to vector<8x512xf32>
    %c0_28 = arith.constant 0 : index
    %c0_29 = arith.constant 0 : index
    %48 = vector.load %arg6[%c0_28, %c0_29] : memref<128x512xf32, #tpu.memory_space<vmem>>, vector<128x512xf32>
    %cst_30 = arith.constant dense<0.000000e+00> : vector<8x512xf32>
    %49 = tpu.matmul %39, %48, %cst_30 {dimension_numbers = #tpu.dot_dimension_numbers<[1], [0], [0], [1], [0, 0, 1, 1], [], []>} : vector<8x128xf32>, vector<128x512xf32>, vector<8x512xf32> -> vector<8x512xf32>
    %50 = arith.addf %47, %49 : vector<8x512xf32>
    %51 = vector.extract_strided_slice %50 {offsets = [0, 0], sizes = [8, 384], strides = [1, 1]} : vector<8x512xf32> to vector<8x384xf32>
    %cst_31 = arith.constant 5.000000e-01 : f32
    %52 = vector.broadcast %cst_31 : f32 to vector<8x384xf32>
    %53 = arith.mulf %52, %51 : vector<8x384xf32>
    %54 = math.tanh %53 : vector<8x384xf32>
    %cst_32 = arith.constant 5.000000e-01 : f32
    %55 = vector.broadcast %cst_32 : f32 to vector<8x384xf32>
    %56 = arith.mulf %55, %54 : vector<8x384xf32>
    %cst_33 = arith.constant 5.000000e-01 : f32
    %57 = vector.broadcast %cst_33 : f32 to vector<8x384xf32>
    %58 = arith.addf %56, %57 : vector<8x384xf32>
    %59 = vector.extract_strided_slice %50 {offsets = [0, 384], sizes = [8, 128], strides = [1, 1]} : vector<8x512xf32> to vector<8x128xf32>
    %60 = math.tanh %59 : vector<8x128xf32>
    %61 = vector.extract_strided_slice %58 {offsets = [0, 0], sizes = [8, 128], strides = [1, 1]} : vector<8x384xf32> to vector<8x128xf32>
    %62 = vector.extract_strided_slice %58 {offsets = [0, 128], sizes = [8, 128], strides = [1, 1]} : vector<8x384xf32> to vector<8x128xf32>
    %63 = vector.extract_strided_slice %58 {offsets = [0, 256], sizes = [8, 128], strides = [1, 1]} : vector<8x384xf32> to vector<8x128xf32>
    %64 = arith.mulf %62, %37 : vector<8x128xf32>
    %65 = arith.mulf %61, %60 : vector<8x128xf32>
    %66 = arith.addf %64, %65 : vector<8x128xf32>
    %67 = math.tanh %66 : vector<8x128xf32>
    %68 = arith.mulf %63, %67 : vector<8x128xf32>
    %69 = arith.index_cast %44 : i32 to index
    %c0_34 = arith.constant 0 : index
    %c0_35 = arith.constant 0 : index
    %70 = vector.load %arg8[%69, %c0_34, %c0_35] : memref<4x8x128xf32, #tpu.memory_space<vmem>>, vector<1x8x128xf32>
    %71 = vector.shape_cast %70 : vector<1x8x128xf32> to vector<8x128xf32>
    %72 = vector.shape_cast %68 : vector<8x128xf32> to vector<1x8x128xf32>
    tpu.vector_store %arg8[%69, %c0_34, %c0_35], %72 {strides = array<i32>} : memref<4x8x128xf32, #tpu.memory_space<vmem>>, vector<1x8x128xf32>,
    %c2_i32 = arith.constant 2 : i32
    %c3_i32_36 = arith.constant 3 : i32
    %73 = arith.subi %c3_i32_36, %c2_i32 : i32
    %74 = arith.index_cast %73 : i32 to index
    %c0_37 = arith.constant 0 : index
    %c0_38 = arith.constant 0 : index
    %75 = vector.load %arg12[%74, %c0_37, %c0_38] : memref<4x8x512xf32, #tpu.memory_space<vmem>>, vector<1x8x512xf32>
    %76 = vector.shape_cast %75 : vector<1x8x512xf32> to vector<8x512xf32>
    %c0_39 = arith.constant 0 : index
    %c0_40 = arith.constant 0 : index
    %77 = vector.load %arg6[%c0_39, %c0_40] : memref<128x512xf32, #tpu.memory_space<vmem>>, vector<128x512xf32>
    %cst_41 = arith.constant dense<0.000000e+00> : vector<8x512xf32>
    %78 = tpu.matmul %68, %77, %cst_41 {dimension_numbers = #tpu.dot_dimension_numbers<[1], [0], [0], [1], [0, 0, 1, 1], [], []>} : vector<8x128xf32>, vector<128x512xf32>, vector<8x512xf32> -> vector<8x512xf32>
    %79 = arith.addf %76, %78 : vector<8x512xf32>
    %80 = vector.extract_strided_slice %79 {offsets = [0, 0], sizes = [8, 384], strides = [1, 1]} : vector<8x512xf32> to vector<8x384xf32>
    %cst_42 = arith.constant 5.000000e-01 : f32
    %81 = vector.broadcast %cst_42 : f32 to vector<8x384xf32>
    %82 = arith.mulf %81, %80 : vector<8x384xf32>
    %83 = math.tanh %82 : vector<8x384xf32>
    %cst_43 = arith.constant 5.000000e-01 : f32
    %84 = vector.broadcast %cst_43 : f32 to vector<8x384xf32>
    %85 = arith.mulf %84, %83 : vector<8x384xf32>
    %cst_44 = arith.constant 5.000000e-01 : f32
    %86 = vector.broadcast %cst_44 : f32 to vector<8x384xf32>
    %87 = arith.addf %85, %86 : vector<8x384xf32>
    %88 = vector.extract_strided_slice %79 {offsets = [0, 384], sizes = [8, 128], strides = [1, 1]} : vector<8x512xf32> to vector<8x128xf32>
    %89 = math.tanh %88 : vector<8x128xf32>
    %90 = vector.extract_strided_slice %87 {offsets = [0, 0], sizes = [8, 128], strides = [1, 1]} : vector<8x384xf32> to vector<8x128xf32>
    %91 = vector.extract_strided_slice %87 {offsets = [0, 128], sizes = [8, 128], strides = [1, 1]} : vector<8x384xf32> to vector<8x128xf32>
    %92 = vector.extract_strided_slice %87 {offsets = [0, 256], sizes = [8, 128], strides = [1, 1]} : vector<8x384xf32> to vector<8x128xf32>
    %93 = arith.mulf %91, %66 : vector<8x128xf32>
    %94 = arith.mulf %90, %89 : vector<8x128xf32>
    %95 = arith.addf %93, %94 : vector<8x128xf32>
    %96 = math.tanh %95 : vector<8x128xf32>
    %97 = arith.mulf %92, %96 : vector<8x128xf32>
    %98 = arith.index_cast %73 : i32 to index
    %c0_45 = arith.constant 0 : index
    %c0_46 = arith.constant 0 : index
    %99 = vector.load %arg8[%98, %c0_45, %c0_46] : memref<4x8x128xf32, #tpu.memory_space<vmem>>, vector<1x8x128xf32>
    %100 = vector.shape_cast %99 : vector<1x8x128xf32> to vector<8x128xf32>
    %101 = vector.shape_cast %97 : vector<8x128xf32> to vector<1x8x128xf32>
    tpu.vector_store %arg8[%98, %c0_45, %c0_46], %101 {strides = array<i32>} : memref<4x8x128xf32, #tpu.memory_space<vmem>>, vector<1x8x128xf32>,
    %c3_i32_47 = arith.constant 3 : i32
    %c3_i32_48 = arith.constant 3 : i32
    %102 = arith.subi %c3_i32_48, %c3_i32_47 : i32
    %103 = arith.index_cast %102 : i32 to index
    %c0_49 = arith.constant 0 : index
    %c0_50 = arith.constant 0 : index
    %104 = vector.load %arg12[%103, %c0_49, %c0_50] : memref<4x8x512xf32, #tpu.memory_space<vmem>>, vector<1x8x512xf32>
    %105 = vector.shape_cast %104 : vector<1x8x512xf32> to vector<8x512xf32>
    %c0_51 = arith.constant 0 : index
    %c0_52 = arith.constant 0 : index
    %106 = vector.load %arg6[%c0_51, %c0_52] : memref<128x512xf32, #tpu.memory_space<vmem>>, vector<128x512xf32>
    %cst_53 = arith.constant dense<0.000000e+00> : vector<8x512xf32>
    %107 = tpu.matmul %97, %106, %cst_53 {dimension_numbers = #tpu.dot_dimension_numbers<[1], [0], [0], [1], [0, 0, 1, 1], [], []>} : vector<8x128xf32>, vector<128x512xf32>, vector<8x512xf32> -> vector<8x512xf32>
    %108 = arith.addf %105, %107 : vector<8x512xf32>
    %109 = vector.extract_strided_slice %108 {offsets = [0, 0], sizes = [8, 384], strides = [1, 1]} : vector<8x512xf32> to vector<8x384xf32>
    %cst_54 = arith.constant 5.000000e-01 : f32
    %110 = vector.broadcast %cst_54 : f32 to vector<8x384xf32>
    %111 = arith.mulf %110, %109 : vector<8x384xf32>
    %112 = math.tanh %111 : vector<8x384xf32>
    %cst_55 = arith.constant 5.000000e-01 : f32
    %113 = vector.broadcast %cst_55 : f32 to vector<8x384xf32>
    %114 = arith.mulf %113, %112 : vector<8x384xf32>
    %cst_56 = arith.constant 5.000000e-01 : f32
    %115 = vector.broadcast %cst_56 : f32 to vector<8x384xf32>
    %116 = arith.addf %114, %115 : vector<8x384xf32>
    %117 = vector.extract_strided_slice %108 {offsets = [0, 384], sizes = [8, 128], strides = [1, 1]} : vector<8x512xf32> to vector<8x128xf32>
    %118 = math.tanh %117 : vector<8x128xf32>
    %119 = vector.extract_strided_slice %116 {offsets = [0, 0], sizes = [8, 128], strides = [1, 1]} : vector<8x384xf32> to vector<8x128xf32>
    %120 = vector.extract_strided_slice %116 {offsets = [0, 128], sizes = [8, 128], strides = [1, 1]} : vector<8x384xf32> to vector<8x128xf32>
    %121 = vector.extract_strided_slice %116 {offsets = [0, 256], sizes = [8, 128], strides = [1, 1]} : vector<8x384xf32> to vector<8x128xf32>
    %122 = arith.mulf %120, %95 : vector<8x128xf32>
    %123 = arith.mulf %119, %118 : vector<8x128xf32>
    %124 = arith.addf %122, %123 : vector<8x128xf32>
    %125 = math.tanh %124 : vector<8x128xf32>
    %126 = arith.mulf %121, %125 : vector<8x128xf32>
    %127 = arith.index_cast %102 : i32 to index
    %c0_57 = arith.constant 0 : index
    %c0_58 = arith.constant 0 : index
    %128 = vector.load %arg8[%127, %c0_57, %c0_58] : memref<4x8x128xf32, #tpu.memory_space<vmem>>, vector<1x8x128xf32>
    %129 = vector.shape_cast %128 : vector<1x8x128xf32> to vector<8x128xf32>
    %130 = vector.shape_cast %126 : vector<8x128xf32> to vector<1x8x128xf32>
    tpu.vector_store %arg8[%127, %c0_57, %c0_58], %130 {strides = array<i32>} : memref<4x8x128xf32, #tpu.memory_space<vmem>>, vector<1x8x128xf32>,
    %c4_i32 = arith.constant 4 : i32
    %c0_59 = arith.constant 0 : index
    %c0_60 = arith.constant 0 : index
    %131 = vector.load %arg10[%c0_59, %c0_60] : memref<8x128xf32, #tpu.memory_space<vmem>>, vector<8x128xf32>
    tpu.vector_store %arg10[%c0_59, %c0_60], %126 {strides = array<i32>} : memref<8x128xf32, #tpu.memory_space<vmem>>, vector<8x128xf32>,
    %c0_61 = arith.constant 0 : index
    %c0_62 = arith.constant 0 : index
    %132 = vector.load %arg11[%c0_61, %c0_62] : memref<8x128xf32, #tpu.memory_space<vmem>>, vector<8x128xf32>
    tpu.vector_store %arg11[%c0_61, %c0_62], %124 {strides = array<i32>} : memref<8x128xf32, #tpu.memory_space<vmem>>, vector<8x128xf32>,
    %c3_i32_63 = arith.constant 3 : i32
    %133 = arith.cmpi eq, %arg1, %c3_i32_63 : i32
    %134 = arith.extui %133 : i1 to i32
    %c0_i32_64 = arith.constant 0 : i32
    %135 = arith.cmpi ne, %134, %c0_i32_64 : i32
    scf.if %135 {
      %c0_65 = arith.constant 0 : index
      %c0_66 = arith.constant 0 : index
      %136 = vector.load %arg9[%c0_65, %c0_66] : memref<8x128xf32, #tpu.memory_space<vmem>>, vector<8x128xf32>
      tpu.vector_store %arg9[%c0_65, %c0_66], %124 {strides = array<i32>} : memref<8x128xf32, #tpu.memory_space<vmem>>, vector<8x128xf32>,
    } else {
    }
    return
  }
  func.func @transform_0(%arg0: i32, %arg1: i32) -> (i32, i32, i32) {
    %c3_i32 = arith.constant 3 : i32
    %0 = arith.subi %c3_i32, %arg1 : i32
    %c0_i32 = arith.constant 0 : i32
    %c0_i32_0 = arith.constant 0 : i32
    return %0, %arg0, %c0_i32 : i32, i32, i32
  }
  func.func @transform_1(%arg0: i32, %arg1: i32) -> (i32, i32) {
    %c0_i32 = arith.constant 0 : i32
    %c0_i32_0 = arith.constant 0 : i32
    return %arg0, %c0_i32 : i32, i32
  }
  func.func @transform_2(%arg0: i32, %arg1: i32) -> (i32, i32) {
    %c0_i32 = arith.constant 0 : i32
    %c0_i32_0 = arith.constant 0 : i32
    return %arg0, %c0_i32 : i32, i32
  }
  func.func @transform_3(%arg0: i32, %arg1: i32) -> (i32, i32) {
    %c0_i32 = arith.constant 0 : i32
    %c0_i32_0 = arith.constant 0 : i32
    %c0_i32_1 = arith.constant 0 : i32
    return %c0_i32, %c0_i32_0 : i32, i32
  }
  func.func @transform_4(%arg0: i32, %arg1: i32) -> (i32, i32) {
    %c0_i32 = arith.constant 0 : i32
    %c0_i32_0 = arith.constant 0 : i32
    %c0_i32_1 = arith.constant 0 : i32
    return %c0_i32, %c0_i32_0 : i32, i32
  }
  func.func @transform_5(%arg0: i32, %arg1: i32) -> (i32, i32) {
    %c0_i32 = arith.constant 0 : i32
    %c0_i32_0 = arith.constant 0 : i32
    %c0_i32_1 = arith.constant 0 : i32
    return %c0_i32, %c0_i32_0 : i32, i32
  }
  func.func @transform_6(%arg0: i32, %arg1: i32) -> (i32, i32, i32) {
    %c3_i32 = arith.constant 3 : i32
    %0 = arith.subi %c3_i32, %arg1 : i32
    %c0_i32 = arith.constant 0 : i32
    %c0_i32_0 = arith.constant 0 : i32
    return %0, %arg0, %c0_i32 : i32, i32, i32
  }
  func.func @transform_7(%arg0: i32, %arg1: i32) -> (i32, i32) {
    %c0_i32 = arith.constant 0 : i32
    %c0_i32_0 = arith.constant 0 : i32
    return %arg0, %c0_i32 : i32, i32
  }
}

</mosaic_0001>

<llo_original>
// kernel: tpu_custom_call.1
$region0: #{tpu_custom_call.1}
  #allocation0 [shape = 'u32[]', space=smem, size = 0x4, offset = 0x4, fixed_abs, tag = 'smem constant byte address 0x4 - core index']
  #allocation1 [shape = 'u32[144,128]{1,0:T(1,128)}', space=vmem, size = 0x12000, scoped, tag = 'internal scratch']
  #allocation2 [shape = 'f32[8,128]{1,0:T(8,128)}', space=vmem, size = 0x1000, scoped, tag = 'scratch operand']
  #allocation3 [shape = 'f32[8,128]{1,0:T(8,128)}', space=vmem, size = 0x1000, scoped, tag = 'scratch operand']
  #allocation4 [shape = 'f32[4,8,512]{2,1,0:T(8,128)}', space=vmem, size = 0x10000, scoped, tag = 'scratch operand']
  %s0 = inlined_call_operand.hbm [shape: f32[16,8,64], index: 0, kind: input, shape index: {}]
  %s1 = inlined_call_operand.hbm [shape: f32[8,128], index: 1, kind: input, shape index: {}]
  %s2 = inlined_call_operand.hbm [shape: f32[8,128], index: 2, kind: input, shape index: {}]
  %s3 = inlined_call_operand.hbm [shape: f32[64,512], index: 3, kind: input, shape index: {}]
  %s4 = inlined_call_operand.hbm [shape: f32[128,512], index: 4, kind: input, shape index: {}]
  %s5 = inlined_call_operand.vmem [shape: f32[1,512], index: 5, kind: input, shape index: {}]
  %s6 = inlined_call_operand.hbm [shape: f32[16,8,128], index: 6, kind: output, shape index: {0}]
  %s7 = inlined_call_operand.hbm [shape: f32[8,128], index: 7, kind: output, shape index: {1}]
  %8 = xla_tuple %s6, %s7
  %s9 = sld [smem:[#allocation0]]
  $region93: #{tpu_custom_call.1} parent=0
    _
  %s11 = ssub.s32 1, %s9
  %s12 = scalar_select 0, %s11, %s9
  $region1: #{tpu_custom_call.1} parent=0
    #allocation5 [shape = 'u8[32768]{0}', space=vmem, size = 0x8000, scoped, tag = 'input window, operand 0']
    #allocation6 [shape = 's32[2]{0}', space=sflag, size = 0x8, scoped, tag = 'scoped memory for tpu_custom_call.1']
    #allocation7 [shape = 's32[2]{0}', space=sflag, size = 0x8, scoped, tag = 'scoped memory for tpu_custom_call.1']
    #allocation8 [shape = 'u8[4096]{0}', space=vmem, size = 0x1000, scoped, tag = 'input window, operand 1, single buffered']
    #allocation9 [shape = 's32[1]{0}', space=sflag, size = 0x4, scoped, tag = 'scoped memory for tpu_custom_call.1']
    #allocation10 [shape = 'u8[4096]{0}', space=vmem, size = 0x1000, scoped, tag = 'input window, operand 2, single buffered']
    #allocation11 [shape = 'u8[131072]{0}', space=vmem, size = 0x20000, scoped, tag = 'input window, operand 3, single buffered']
    #allocation12 [shape = 's32[1]{0}', space=sflag, size = 0x4, scoped, tag = 'scoped memory for tpu_custom_call.1']
    #allocation13 [shape = 'u8[262144]{0}', space=vmem, size = 0x40000, scoped, tag = 'input window, operand 4, single buffered']
    #allocation14 [shape = 'u8[32768]{0}', space=vmem, size = 0x8000, scoped, tag = 'output window, operand 0']
    #allocation15 [shape = 'u8[4096]{0}', space=vmem, size = 0x1000, scoped, tag = 'output window, operand 1, single buffered']
    #allocation16 [shape = 's32[1]{0}', space=sflag, size = 0x4, scoped, tag = 'scoped memory for tpu_custom_call.1']
    %13 = vsyncpa [#allocation6], 0
    %s14 = scalar_lea.sflag [#allocation6], 1
    %15 = vsyncpa %s14, 0
    %16 = vsyncpa [#allocation9], 0
    %17 = vsyncpa [#allocation12], 0
    %18 = vsyncpa [#allocation7], 0
    %s19 = scalar_lea.sflag [#allocation7], 1
    %20 = vsyncpa %s19, 0
    %21 = vsyncpa [#allocation16], 0
    loop: start=0, step=1, limit=6
    $region2: #{tpu_custom_call.1} parent=1 // loop_pre_header
      _
    $region3: #{tpu_custom_call.1} parent=1 // loop_header
      %s23 = sphi 0, %s27
      %p24 = scmp.ge.s32.totalorder %s23, 6
      %s30 = sphi 0, %s42
      %s31 = sphi 0, %s38
      %s32 = sphi 0, %s30
      %s33 = sphi 0, %s31
      %s34 = sphi 0, %s32
      %s35 = sphi 0, %s33
      %s49 = sphi 0, %s51
      %s52 = sphi 0, %s49
      %s53 = sphi 0, %s52
      %s69 = sphi 0, %s53
      %s75 = sphi 0, %s77
      %s78 = sphi 0, %s75
      %s79 = sphi 0, %s78
      %s95 = sphi 0, %s79
      %s101 = sphi 0, %s103
      %s104 = sphi 0, %s101
      %s105 = sphi 0, %s104
      %s121 = sphi 0, %s105
      %s125 = sphi 0, %s125
      %s127 = sphi 0, %s125
      %s128 = sphi 0, %s127
      %s142 = sphi 0, %s128
      %s146 = sphi 0, %s146
      %s148 = sphi 0, %s146
      %s149 = sphi 0, %s148
      %s163 = sphi 0, %s149
      %s167 = sphi 0, %s167
      %s169 = sphi 0, %s167
      %s170 = sphi 0, %s169
      %s184 = sphi 0, %s170
      %s194 = sphi 0, %s196
      %s197 = sphi 0, %s194
      %s198 = sphi 0, %s197
      %s214 = sphi 0, %s198
      %s220 = sphi 0, %s222
      %s223 = sphi 0, %s220
      %s224 = sphi 0, %s223
      %s240 = sphi 0, %s224
    $region4: #{tpu_custom_call.1} parent=1 // loop_header_branch
      %26 = sbr.rel (%p24) target = $region8
    $region5: #{tpu_custom_call.1} parent=1 // loop_body
      %s28 = ssub.s32 %s23, 1
      %s29 = ssub.s32 %s23, 2
      %s36 = sadd.s32 1, %s31
      %p37 = scmp.ge.s32.totalorder %s36, 4
      %s38 = scalar_select %p37, 0, %s36
      %s39 = sadd.s32 1, %s30
      %s40 = scalar_select %p37, %s39, %s30
      %p41 = scmp.ge.s32.totalorder %s40, 1
      %s42 = scalar_select %p41, 0, %s40
      %s43 = ssub.s32 3, %s31
      %s44 = ssub.s32 3, %s38
      %s45 = ssub.s32 %s43, %s44
      %s46 = ssub.s32 %s30, %s42
      %s47 = sor.u32 %s45, %s46
      %p48 = scmp.eq.s32.totalorder %s47, 0
      %s50 = sadd.s32 %s49, 1
      %s51 = scalar_select %p48, %s49, %s50
      %p54 = pneg %p48
      %p55 = scmp.eq.s32.totalorder %s23, 3
      %p56 = por %p54, %p55
      %p57 = scmp.ne.s32.totalorder %s49, %s52
      %p58 = scmp.eq.s32.totalorder %s23, 0
      %p59 = por %p57, %p58
      %p60 = scmp.ne.s32.totalorder %s49, %s52
      %p61 = scmp.eq.s32.totalorder %s28, 3
      %p62 = por %p60, %p61
      %p63 = scmp.ne.s32.totalorder %s52, %s53
      %p64 = scmp.eq.s32.totalorder %s28, 0
      %p65 = por %p63, %p64
      %p66 = scmp.ne.s32.totalorder %s52, %s53
      %p67 = scmp.eq.s32.totalorder %s29, 3
      %p68 = por %p66, %p67
      %p70 = scmp.ne.s32.totalorder %s53, %s69
      %p71 = scmp.eq.s32.totalorder %s29, 0
      %p72 = por %p70, %p71
      %s73 = ssub.s32 %s30, %s42
      %p74 = scmp.eq.s32.totalorder %s73, 0
      %s76 = sadd.s32 %s75, 1
      %s77 = scalar_select %p74, %s75, %s76
      %p80 = pneg %p74
      %p81 = scmp.eq.s32.totalorder %s23, 3
      %p82 = por %p80, %p81
      %p83 = scmp.ne.s32.totalorder %s75, %s78
      %p84 = scmp.eq.s32.totalorder %s23, 0
      %p85 = por %p83, %p84
      %p86 = scmp.ne.s32.totalorder %s75, %s78
      %p87 = scmp.eq.s32.totalorder %s28, 3
      %p88 = por %p86, %p87
      %p89 = scmp.ne.s32.totalorder %s78, %s79
      %p90 = scmp.eq.s32.totalorder %s28, 0
      %p91 = por %p89, %p90
      %p92 = scmp.ne.s32.totalorder %s78, %s79
      %p93 = scmp.eq.s32.totalorder %s29, 3
      %p94 = por %p92, %p93
      %p96 = scmp.ne.s32.totalorder %s79, %s95
      %p97 = scmp.eq.s32.totalorder %s29, 0
      %p98 = por %p96, %p97
      %s99 = ssub.s32 %s30, %s42
      %p100 = scmp.eq.s32.totalorder %s99, 0
      %s102 = sadd.s32 %s101, 1
      %s103 = scalar_select %p100, %s101, %s102
      %p106 = pneg %p100
      %p107 = scmp.eq.s32.totalorder %s23, 3
      %p108 = por %p106, %p107
      %p109 = scmp.ne.s32.totalorder %s101, %s104
      %p110 = scmp.eq.s32.totalorder %s23, 0
      %p111 = por %p109, %p110
      %p112 = scmp.ne.s32.totalorder %s101, %s104
      %p113 = scmp.eq.s32.totalorder %s28, 3
      %p114 = por %p112, %p113
      %p115 = scmp.ne.s32.totalorder %s104, %s105
      %p116 = scmp.eq.s32.totalorder %s28, 0
      %p117 = por %p115, %p116
      %p118 = scmp.ne.s32.totalorder %s104, %s105
      %p119 = scmp.eq.s32.totalorder %s29, 3
      %p120 = por %p118, %p119
      %p122 = scmp.ne.s32.totalorder %s105, %s121
      %p123 = scmp.eq.s32.totalorder %s29, 0
      %p124 = por %p122, %p123
      %s126 = sadd.s32 %s125, 1
      %p129 = scmp.eq.s32.totalorder %s23, 3
      %p130 = scmp.ne.s32.totalorder %s125, %s127
      %p131 = scmp.eq.s32.totalorder %s23, 0
      %p132 = por %p130, %p131
      %p133 = scmp.ne.s32.totalorder %s125, %s127
      %p134 = scmp.eq.s32.totalorder %s28, 3
      %p135 = por %p133, %p134
      %p136 = scmp.ne.s32.totalorder %s127, %s128
      %p137 = scmp.eq.s32.totalorder %s28, 0
      %p138 = por %p136, %p137
      %p139 = scmp.ne.s32.totalorder %s127, %s128
      %p140 = scmp.eq.s32.totalorder %s29, 3
      %p141 = por %p139, %p140
      %p143 = scmp.ne.s32.totalorder %s128, %s142
      %p144 = scmp.eq.s32.totalorder %s29, 0
      %p145 = por %p143, %p144
      %s147 = sadd.s32 %s146, 1
      %p150 = scmp.eq.s32.totalorder %s23, 3
      %p151 = scmp.ne.s32.totalorder %s146, %s148
      %p152 = scmp.eq.s32.totalorder %s23, 0
      %p153 = por %p151, %p152
      %p154 = scmp.ne.s32.totalorder %s146, %s148
      %p155 = scmp.eq.s32.totalorder %s28, 3
      %p156 = por %p154, %p155
      %p157 = scmp.ne.s32.totalorder %s148, %s149
      %p158 = scmp.eq.s32.totalorder %s28, 0
      %p159 = por %p157, %p158
      %p160 = scmp.ne.s32.totalorder %s148, %s149
      %p161 = scmp.eq.s32.totalorder %s29, 3
      %p162 = por %p160, %p161
      %p164 = scmp.ne.s32.totalorder %s149, %s163
      %p165 = scmp.eq.s32.totalorder %s29, 0
      %p166 = por %p164, %p165
      %s168 = sadd.s32 %s167, 1
      %p171 = scmp.eq.s32.totalorder %s23, 3
      %p172 = scmp.ne.s32.totalorder %s167, %s169
      %p173 = scmp.eq.s32.totalorder %s23, 0
      %p174 = por %p172, %p173
      %p175 = scmp.ne.s32.totalorder %s167, %s169
      %p176 = scmp.eq.s32.totalorder %s28, 3
      %p177 = por %p175, %p176
      %p178 = scmp.ne.s32.totalorder %s169, %s170
      %p179 = scmp.eq.s32.totalorder %s28, 0
      %p180 = por %p178, %p179
      %p181 = scmp.ne.s32.totalorder %s169, %s170
      %p182 = scmp.eq.s32.totalorder %s29, 3
      %p183 = por %p181, %p182
      %p185 = scmp.ne.s32.totalorder %s170, %s184
      %p186 = scmp.eq.s32.totalorder %s29, 0
      %p187 = por %p185, %p186
      %s188 = ssub.s32 3, %s31
      %s189 = ssub.s32 3, %s38
      %s190 = ssub.s32 %s188, %s189
      %s191 = ssub.s32 %s30, %s42
      %s192 = sor.u32 %s190, %s191
      %p193 = scmp.eq.s32.totalorder %s192, 0
      %s195 = sadd.s32 %s194, 1
      %s196 = scalar_select %p193, %s194, %s195
      %p199 = pneg %p193
      %p200 = scmp.eq.s32.totalorder %s23, 3
      %p201 = por %p199, %p200
      %p202 = scmp.ne.s32.totalorder %s194, %s197
      %p203 = scmp.eq.s32.totalorder %s23, 0
      %p204 = por %p202, %p203
      %p205 = scmp.ne.s32.totalorder %s194, %s197
      %p206 = scmp.eq.s32.totalorder %s28, 3
      %p207 = por %p205, %p206
      %p208 = scmp.ne.s32.totalorder %s197, %s198
      %p209 = scmp.eq.s32.totalorder %s28, 0
      %p210 = por %p208, %p209
      %p211 = scmp.ne.s32.totalorder %s197, %s198
      %p212 = scmp.eq.s32.totalorder %s29, 3
      %p213 = por %p211, %p212
      %p215 = scmp.ne.s32.totalorder %s198, %s214
      %p216 = scmp.eq.s32.totalorder %s29, 0
      %p217 = por %p215, %p216
      %s218 = ssub.s32 %s30, %s42
      %p219 = scmp.eq.s32.totalorder %s218, 0
      %s221 = sadd.s32 %s220, 1
      %s222 = scalar_select %p219, %s220, %s221
      %p225 = pneg %p219
      %p226 = scmp.eq.s32.totalorder %s23, 3
      %p227 = por %p225, %p226
      %p228 = scmp.ne.s32.totalorder %s220, %s223
      %p229 = scmp.eq.s32.totalorder %s23, 0
      %p230 = por %p228, %p229
      %p231 = scmp.ne.s32.totalorder %s220, %s223
      %p232 = scmp.eq.s32.totalorder %s28, 3
      %p233 = por %p231, %p232
      %p234 = scmp.ne.s32.totalorder %s223, %s224
      %p235 = scmp.eq.s32.totalorder %s28, 0
      %p236 = por %p234, %p235
      %p237 = scmp.ne.s32.totalorder %s223, %s224
      %p238 = scmp.eq.s32.totalorder %s29, 3
      %p239 = por %p237, %p238
      %p241 = scmp.ne.s32.totalorder %s224, %s240
      %p242 = scmp.eq.s32.totalorder %s29, 0
      %p243 = por %p241, %p242
      %p244 = scmp.le.s32.totalorder 1, %s23
      %p245 = scmp.lt.s32.totalorder %s23, 5
      %p246 = pnand %p244, %p245
      %p247 = pneg %p246
      // Predicated region
      $region9: #{tpu_custom_call.1} parent=5 // pred_check
        _
      $region10: #{tpu_custom_call.1} parent=5 // pred_check_branch
        %249 = sbr.rel (%p246) target = $region12
      $region11: #{tpu_custom_call.1} parent=5 // pred_region
        %s250 = ssub.s32 %s23, 1
        // Predicated region
        $region13: #{tpu_custom_call.1} parent=11 // pred_check
          %p251 = pneg %p91
        $region14: #{tpu_custom_call.1} parent=11 // pred_check_branch
          %253 = sbr.rel (%p251) target = $region16
        $region15: #{tpu_custom_call.1} parent=11 // pred_region
          %s255 = ssub.s32 128, 128
          %256 = vsyncadd [#allocation9], %s255
          %s257 = smul.addr %s32, 128
          %s258 = scalar_lea.hbm %s1, %s257
          %s260 = sshll.u32 [#allocation8], 4
          %s261 = int_to_ptr.vmem [resolvable:$true] %s260
          %263 = dma.hbm_to_vmem [thread:$0]  %s258, 128, %s261, [#allocation9]
        $region16: #{tpu_custom_call.1} parent=11 // pred_fallthru
          _
        // Predicated region
        $region17: #{tpu_custom_call.1} parent=11 // pred_check
          %p264 = pneg %p117
        $region18: #{tpu_custom_call.1} parent=11 // pred_check_branch
          %266 = sbr.rel (%p264) target = $region20
        $region19: #{tpu_custom_call.1} parent=11 // pred_region
          %s268 = ssub.s32 128, 128
          %269 = vsyncadd [#allocation9], %s268
          %s270 = smul.addr %s32, 128
          %s271 = scalar_lea.hbm %s2, %s270
          %s273 = sshll.u32 [#allocation10], 4
          %s274 = int_to_ptr.vmem [resolvable:$true] %s273
          %276 = dma.hbm_to_vmem [thread:$0]  %s271, 128, %s274, [#allocation9]
        $region20: #{tpu_custom_call.1} parent=11 // pred_fallthru
          _
        // Predicated region
        $region21: #{tpu_custom_call.1} parent=11 // pred_check
          %p277 = pneg %p138
        $region22: #{tpu_custom_call.1} parent=11 // pred_check_branch
          %279 = sbr.rel (%p277) target = $region24
        $region23: #{tpu_custom_call.1} parent=11 // pred_region
          %s281 = ssub.s32 4096, 4096
          %282 = vsyncadd [#allocation12], %s281
          %s283 = sshll.u32 [#allocation11], 4
          %s284 = int_to_ptr.vmem [resolvable:$true] %s283
          %289 = dma.hbm_to_vmem [thread:$0]  %s3, 4096, %s284, [#allocation12], 512, 512, 32
        $region24: #{tpu_custom_call.1} parent=11 // pred_fallthru
          _
        // Predicated region
        $region25: #{tpu_custom_call.1} parent=11 // pred_check
          %p290 = pneg %p159
        $region26: #{tpu_custom_call.1} parent=11 // pred_check_branch
          %292 = sbr.rel (%p290) target = $region28
        $region27: #{tpu_custom_call.1} parent=11 // pred_region
          %s294 = ssub.s32 8192, 8192
          %295 = vsyncadd [#allocation12], %s294
          %s296 = sshll.u32 [#allocation13], 4
          %s297 = int_to_ptr.vmem [resolvable:$true] %s296
          %302 = dma.hbm_to_vmem [thread:$0]  %s4, 8192, %s297, [#allocation12], 512, 512, 32
        $region28: #{tpu_custom_call.1} parent=11 // pred_fallthru
          _
        // Predicated region
        $region29: #{tpu_custom_call.1} parent=11 // pred_check
          %p303 = pneg %p180
        $region30: #{tpu_custom_call.1} parent=11 // pred_check_branch
          %305 = sbr.rel (%p303) target = $region32
        $region31: #{tpu_custom_call.1} parent=11 // pred_region
          _
        $region32: #{tpu_custom_call.1} parent=11 // pred_fallthru
          _
      $region12: #{tpu_custom_call.1} parent=5 // pred_fallthru
        _
      %p306 = scmp.lt.s32.totalorder %s23, 4
      // Predicated region
      $region33: #{tpu_custom_call.1} parent=5 // pred_check
        %p307 = pneg %p306
      $region34: #{tpu_custom_call.1} parent=5 // pred_check_branch
        %309 = sbr.rel (%p307) target = $region36
      $region35: #{tpu_custom_call.1} parent=5 // pred_region
        // Predicated region
        $region37: #{tpu_custom_call.1} parent=35 // pred_check
          %p310 = pneg %p59
        $region38: #{tpu_custom_call.1} parent=35 // pred_check_branch
          %312 = sbr.rel (%p310) target = $region40
        $region39: #{tpu_custom_call.1} parent=35 // pred_region
          %s313 = sand.u32 %s49, 1
          %s314 = scalar_lea.sflag [#allocation6], %s313
          %s315 = sand.u32 %s49, 1
          %s316 = smul.addr %s315, 32
          %s317 = scalar_lea.vmem [#allocation5], %s316
          %s318 = ssub.s32 3, %s31
          %s319 = smul.u32 4, %s318
          %s321 = ssub.s32 512, 512
          %322 = vsyncadd %s314, %s321
          %s323 = sadd.s32 %s30, %s319
          %s324 = smul.addr %s323, 128
          %s325 = scalar_lea.hbm %s0, %s324
          %s326 = sshll.u32 %s317, 4
          %s327 = int_to_ptr.vmem [resolvable:$true] %s326
          %332 = dma.hbm_to_vmem [thread:$0]  %s325, 512, %s327, %s314, 128, 128, 8
        $region40: #{tpu_custom_call.1} parent=35 // pred_fallthru
          _
      $region36: #{tpu_custom_call.1} parent=5 // pred_fallthru
        _
      %p333 = scmp.le.s32.totalorder 1, %s23
      %p334 = scmp.lt.s32.totalorder %s23, 5
      %p335 = pnand %p333, %p334
      %p336 = pneg %p335
      // Predicated region
      $region41: #{tpu_custom_call.1} parent=5 // pred_check
        _
      $region42: #{tpu_custom_call.1} parent=5 // pred_check_branch
        %338 = sbr.rel (%p335) target = $region44
      $region43: #{tpu_custom_call.1} parent=5 // pred_region
        %s339 = ssub.s32 %s23, 1
        %s340 = sand.u32 %s52, 1
        %s341 = scalar_lea.sflag [#allocation6], %s340
        %s342 = sand.u32 %s52, 1
        %s343 = smul.addr %s342, 32
        %s344 = scalar_lea.vmem [#allocation5], %s343
        // Predicated region
        $region45: #{tpu_custom_call.1} parent=43 // pred_check
          %p345 = pneg %p65
        $region46: #{tpu_custom_call.1} parent=43 // pred_check_branch
          %347 = sbr.rel (%p345) target = $region48
        $region47: #{tpu_custom_call.1} parent=43 // pred_region
          %348 = dma.done %s341, 512
        $region48: #{tpu_custom_call.1} parent=43 // pred_fallthru
          _
        // Predicated region
        $region49: #{tpu_custom_call.1} parent=43 // pred_check
          %p349 = pneg %p91
        $region50: #{tpu_custom_call.1} parent=43 // pred_check_branch
          %351 = sbr.rel (%p349) target = $region52
        $region51: #{tpu_custom_call.1} parent=43 // pred_region
          %352 = dma.done [#allocation9], 128
        $region52: #{tpu_custom_call.1} parent=43 // pred_fallthru
          _
        // Predicated region
        $region53: #{tpu_custom_call.1} parent=43 // pred_check
          %p353 = pneg %p117
        $region54: #{tpu_custom_call.1} parent=43 // pred_check_branch
          %355 = sbr.rel (%p353) target = $region56
        $region55: #{tpu_custom_call.1} parent=43 // pred_region
          %356 = dma.done [#allocation9], 128
        $region56: #{tpu_custom_call.1} parent=43 // pred_fallthru
          _
        // Predicated region
        $region57: #{tpu_custom_call.1} parent=43 // pred_check
          %p357 = pneg %p138
        $region58: #{tpu_custom_call.1} parent=43 // pred_check_branch
          %359 = sbr.rel (%p357) target = $region60
        $region59: #{tpu_custom_call.1} parent=43 // pred_region
          %360 = dma.done [#allocation12], 4096
        $region60: #{tpu_custom_call.1} parent=43 // pred_fallthru
          _
        // Predicated region
        $region61: #{tpu_custom_call.1} parent=43 // pred_check
          %p361 = pneg %p159
        $region62: #{tpu_custom_call.1} parent=43 // pred_check_branch
          %363 = sbr.rel (%p361) target = $region64
        $region63: #{tpu_custom_call.1} parent=43 // pred_region
          %364 = dma.done [#allocation12], 8192
        $region64: #{tpu_custom_call.1} parent=43 // pred_fallthru
          _
        %s365 = sand.u32 %s52, 1
        %s366 = scalar_lea.sflag [#allocation6], %s365
        %s367 = sand.u32 %s52, 1
        %s368 = smul.addr %s367, 32
        %s369 = scalar_lea.vmem [#allocation5], %s368
        %p370 = pneg %p65
        %p371 = pneg %p62
        %p372 = pneg %p91
        %p373 = pneg %p88
        %p374 = pneg %p117
        %p375 = pneg %p114
        %p376 = pneg %p138
        %p377 = pneg %p135
        %p378 = pneg %p159
        %p379 = pneg %p156
        %p380 = pneg %p180
        %p381 = pneg %p177
        %p382 = pneg %p210
        %p383 = pneg %p207
        %s384 = sand.u32 %s197, 1
        %s385 = scalar_lea.sflag [#allocation7], %s384
        %s386 = sand.u32 %s197, 1
        %s387 = smul.addr %s386, 32
        %s388 = scalar_lea.vmem [#allocation14], %s387
        %p389 = pneg %p236
        %p390 = pneg %p233
        %s391 = ssub.s32 3, %s33
        %s392 = smul.u32 4, %s391
        %s393 = ssub.s32 3, %s33
        %s394 = smul.u32 4, %s393
        %v395 = vld [vmem:[%s344] sm:$0xff]
        %v396 = vld [vmem:[%s344 + $0x8] sm:$0xff]
        %v397 = vld [vmem:[%s344 + $0x10] sm:$0xff]
        %v398 = vld [vmem:[%s344 + $0x18] sm:$0xff]
        %v399 = vld [vmem:[#allocation11] sm:$0xff]
        %v400 = vld [vmem:[#allocation11 + $0x8] sm:$0xff]
        %v401 = vld [vmem:[#allocation11 + $0x10] sm:$0xff]
        %v402 = vld [vmem:[#allocation11 + $0x18] sm:$0xff]
        %v403 = vld [vmem:[#allocation11 + $0x20] sm:$0xff]
        %v404 = vld [vmem:[#allocation11 + $0x28] sm:$0xff]
        %v405 = vld [vmem:[#allocation11 + $0x30] sm:$0xff]
        %v406 = vld [vmem:[#allocation11 + $0x38] sm:$0xff]
        %v407 = vld [vmem:[#allocation11 + $0x40] sm:$0xff]
        %v408 = vld [vmem:[#allocation11 + $0x48] sm:$0xff]
        %v409 = vld [vmem:[#allocation11 + $0x50] sm:$0xff]
        %v410 = vld [vmem:[#allocation11 + $0x58] sm:$0xff]
        %v411 = vld [vmem:[#allocation11 + $0x60] sm:$0xff]
        %v412 = vld [vmem:[#allocation11 + $0x68] sm:$0xff]
        %v413 = vld [vmem:[#allocation11 + $0x70] sm:$0xff]
        %v414 = vld [vmem:[#allocation11 + $0x78] sm:$0xff]
        %v415 = vld [vmem:[#allocation11 + $0x80] sm:$0xff]
        %v416 = vld [vmem:[#allocation11 + $0x88] sm:$0xff]
        %v417 = vld [vmem:[#allocation11 + $0x90] sm:$0xff]
        %v418 = vld [vmem:[#allocation11 + $0x98] sm:$0xff]
        %v419 = vld [vmem:[#allocation11 + $0xa0] sm:$0xff]
        %v420 = vld [vmem:[#allocation11 + $0xa8] sm:$0xff]
        %v421 = vld [vmem:[#allocation11 + $0xb0] sm:$0xff]
        %v422 = vld [vmem:[#allocation11 + $0xb8] sm:$0xff]
        %v423 = vld [vmem:[#allocation11 + $0xc0] sm:$0xff]
        %v424 = vld [vmem:[#allocation11 + $0xc8] sm:$0xff]
        %v425 = vld [vmem:[#allocation11 + $0xd0] sm:$0xff]
        %v426 = vld [vmem:[#allocation11 + $0xd8] sm:$0xff]
        %v427 = vld [vmem:[#allocation11 + $0xe0] sm:$0xff]
        %v428 = vld [vmem:[#allocation11 + $0xe8] sm:$0xff]
        %v429 = vld [vmem:[#allocation11 + $0xf0] sm:$0xff]
        %v430 = vld [vmem:[#allocation11 + $0xf8] sm:$0xff]
        %vm431 = vcmask 523264
        %v433 = vsel %vm431, %v395, 0
        %v436 = vsel %vm431, %v396, 0
        %v439 = vsel %vm431, %v397, 0
        %v442 = vsel %vm431, %v398, 0
        %444 = vmatprep.subr.mxu0 %v400
        %445 = vmatpush1.msra.mxu0 %v399
        %446 = vmatprep.subr.mxu0 %v404
        %447 = vmatpush1.msra.mxu0 %v403
        %448 = vmatprep.subr.mxu0 %v408
        %449 = vmatpush1.msra.mxu0 %v407
        %450 = vmatprep.subr.mxu0 %v412
        %451 = vmatpush1.msra.mxu0 %v411
        %452 = vmatprep.subr.mxu0 %v416
        %453 = vmatpush1.msra.mxu0 %v415
        %454 = vmatprep.subr.mxu0 %v420
        %455 = vmatpush1.msra.mxu0 %v419
        %456 = vmatprep.subr.mxu0 %v424
        %457 = vmatpush1.msra.mxu0 %v423
        %458 = vmatprep.subr.mxu0 %v428
        %459 = vmatpush1.msra.mxu0 %v427
        %460 = vmatprep.subr.mxu0 0.0
        %461 = vmatpush1.msra.mxu0 0.0
        %462 = vmatprep.subr.mxu0 0.0
        %463 = vmatpush1.msra.mxu0 0.0
        %464 = vmatprep.subr.mxu0 0.0
        %465 = vmatpush1.msra.mxu0 0.0
        %466 = vmatprep.subr.mxu0 0.0
        %467 = vmatpush1.msra.mxu0 0.0
        %468 = vmatprep.subr.mxu0 0.0
        %469 = vmatpush1.msra.mxu0 0.0
        %470 = vmatprep.subr.mxu0 0.0
        %471 = vmatpush1.msra.mxu0 0.0
        %472 = vmatprep.subr.mxu0 0.0
        %473 = vmatpush1.msra.mxu0 0.0
        %474 = vmatprep.subr.mxu0 0.0
        %475 = vmatpush1.msra.mxu0 0.0
        %476 = vmatprep.subr.mxu0 0.0
        %477 = vmatpush1.msra.mxu0 0.0
        %478 = vmatprep.subr.mxu0 0.0
        %479 = vmatpush1.msra.mxu0 0.0
        %480 = vmatprep.subr.mxu0 0.0
        %481 = vmatpush1.msra.mxu0 0.0
        %482 = vmatprep.subr.mxu0 0.0
        %483 = vmatpush1.msra.mxu0 0.0
        %484 = vmatprep.subr.mxu0 0.0
        %485 = vmatpush1.msra.mxu0 0.0
        %486 = vmatprep.subr.mxu0 0.0
        %487 = vmatpush1.msra.mxu0 0.0
        %488 = vmatprep.subr.mxu0 0.0
        %489 = vmatpush1.msra.mxu0 0.0
        %490 = vmatprep.subr.mxu0 0.0
        %491 = vmatpush1.msra.mxu0 0.0
        %492 = vmatprep.subr.mxu0 0.0
        %493 = vmatpush1.msra.mxu0 0.0
        %494 = vmatprep.subr.mxu0 0.0
        %495 = vmatpush1.msra.mxu0 0.0
        %496 = vmatprep.subr.mxu0 0.0
        %497 = vmatpush1.msra.mxu0 0.0
        %498 = vmatprep.subr.mxu0 0.0
        %499 = vmatpush1.msra.mxu0 0.0
        %500 = vmatprep.subr.mxu0 0.0
        %501 = vmatpush1.msra.mxu0 0.0
        %502 = vmatprep.subr.mxu0 0.0
        %503 = vmatpush1.msra.mxu0 0.0
        %504 = vmatprep.subr.mxu0 0.0
        %505 = vmatpush1.msra.mxu0 0.0
        %506 = vmatprep.subr.mxu0 0.0
        %507 = vmatpush1.msra.mxu0 0.0
        %508 = vmatprep.mubr.f32.mxu0 0.0
        %509 = vmatmul.mubr.f32.gmra.mrb[0].mxu0 %v433
        %v510 = vpop.f32.mrb[0].mxu0
        %v511 = vadd.f32 0.0, %v510
        %v512 = vpop.f32.mrb[0].mxu0
        %v513 = vadd.f32 0.0, %v512
        %514 = vmatprep.mubr.f32.mxu0 0.0
        %515 = vmatmul.mubr.f32.gmra.mrb[0].mxu0 %v436
        %v516 = vpop.f32.mrb[0].mxu0
        %v517 = vadd.f32 0.0, %v516
        %v518 = vpop.f32.mrb[0].mxu0
        %v519 = vadd.f32 0.0, %v518
        %520 = vmatprep.mubr.f32.mxu0 0.0
        %521 = vmatmul.mubr.f32.gmra.mrb[0].mxu0 %v439
        %v522 = vpop.f32.mrb[0].mxu0
        %v523 = vadd.f32 0.0, %v522
        %v524 = vpop.f32.mrb[0].mxu0
        %v525 = vadd.f32 0.0, %v524
        %526 = vmatprep.mubr.f32.mxu0 0.0
        %527 = vmatmul.mubr.f32.gmra.mrb[0].mxu0 %v442
        %v528 = vpop.f32.mrb[0].mxu0
        %v529 = vadd.f32 0.0, %v528
        %v530 = vpop.f32.mrb[0].mxu0
        %v531 = vadd.f32 0.0, %v530
        %532 = vdwg.mxu0
        %533 = vmatprep.subr.mxu0 %v402
        %534 = vmatpush1.msra.mxu0 %v401
        %535 = vmatprep.subr.mxu0 %v406
        %536 = vmatpush1.msra.mxu0 %v405
        %537 = vmatprep.subr.mxu0 %v410
        %538 = vmatpush1.msra.mxu0 %v409
        %539 = vmatprep.subr.mxu0 %v414
        %540 = vmatpush1.msra.mxu0 %v413
        %541 = vmatprep.subr.mxu0 %v418
        %542 = vmatpush1.msra.mxu0 %v417
        %543 = vmatprep.subr.mxu0 %v422
        %544 = vmatpush1.msra.mxu0 %v421
        %545 = vmatprep.subr.mxu0 %v426
        %546 = vmatpush1.msra.mxu0 %v425
        %547 = vmatprep.subr.mxu0 %v430
        %548 = vmatpush1.msra.mxu0 %v429
        %549 = vmatprep.subr.mxu0 0.0
        %550 = vmatpush1.msra.mxu0 0.0
        %551 = vmatprep.subr.mxu0 0.0
        %552 = vmatpush1.msra.mxu0 0.0
        %553 = vmatprep.subr.mxu0 0.0
        %554 = vmatpush1.msra.mxu0 0.0
        %555 = vmatprep.subr.mxu0 0.0
        %556 = vmatpush1.msra.mxu0 0.0
        %557 = vmatprep.subr.mxu0 0.0
        %558 = vmatpush1.msra.mxu0 0.0
        %559 = vmatprep.subr.mxu0 0.0
        %560 = vmatpush1.msra.mxu0 0.0
        %561 = vmatprep.subr.mxu0 0.0
        %562 = vmatpush1.msra.mxu0 0.0
        %563 = vmatprep.subr.mxu0 0.0
        %564 = vmatpush1.msra.mxu0 0.0
        %565 = vmatprep.subr.mxu0 0.0
        %566 = vmatpush1.msra.mxu0 0.0
        %567 = vmatprep.subr.mxu0 0.0
        %568 = vmatpush1.msra.mxu0 0.0
        %569 = vmatprep.subr.mxu0 0.0
        %570 = vmatpush1.msra.mxu0 0.0
        %571 = vmatprep.subr.mxu0 0.0
        %572 = vmatpush1.msra.mxu0 0.0
        %573 = vmatprep.subr.mxu0 0.0
        %574 = vmatpush1.msra.mxu0 0.0
        %575 = vmatprep.subr.mxu0 0.0
        %576 = vmatpush1.msra.mxu0 0.0
        %577 = vmatprep.subr.mxu0 0.0
        %578 = vmatpush1.msra.mxu0 0.0
        %579 = vmatprep.subr.mxu0 0.0
        %580 = vmatpush1.msra.mxu0 0.0
        %581 = vmatprep.subr.mxu0 0.0
        %582 = vmatpush1.msra.mxu0 0.0
        %583 = vmatprep.subr.mxu0 0.0
        %584 = vmatpush1.msra.mxu0 0.0
        %585 = vmatprep.subr.mxu0 0.0
        %586 = vmatpush1.msra.mxu0 0.0
        %587 = vmatprep.subr.mxu0 0.0
        %588 = vmatpush1.msra.mxu0 0.0
        %589 = vmatprep.subr.mxu0 0.0
        %590 = vmatpush1.msra.mxu0 0.0
        %591 = vmatprep.subr.mxu0 0.0
        %592 = vmatpush1.msra.mxu0 0.0
        %593 = vmatprep.subr.mxu0 0.0
        %594 = vmatpush1.msra.mxu0 0.0
        %595 = vmatprep.subr.mxu0 0.0
        %596 = vmatpush1.msra.mxu0 0.0
        %597 = vmatprep.mubr.f32.mxu0 0.0
        %598 = vmatmul.mubr.f32.gmra.mrb[0].mxu0 %v433
        %v599 = vpop.f32.mrb[0].mxu0
        %v600 = vadd.f32 0.0, %v599
        %v601 = vpop.f32.mrb[0].mxu0
        %v602 = vadd.f32 0.0, %v601
        %603 = vmatprep.mubr.f32.mxu0 0.0
        %604 = vmatmul.mubr.f32.gmra.mrb[0].mxu0 %v436
        %v605 = vpop.f32.mrb[0].mxu0
        %v606 = vadd.f32 0.0, %v605
        %v607 = vpop.f32.mrb[0].mxu0
        %v608 = vadd.f32 0.0, %v607
        %609 = vmatprep.mubr.f32.mxu0 0.0
        %610 = vmatmul.mubr.f32.gmra.mrb[0].mxu0 %v439
        %v611 = vpop.f32.mrb[0].mxu0
        %v612 = vadd.f32 0.0, %v611
        %v613 = vpop.f32.mrb[0].mxu0
        %v614 = vadd.f32 0.0, %v613
        %615 = vmatprep.mubr.f32.mxu0 0.0
        %616 = vmatmul.mubr.f32.gmra.mrb[0].mxu0 %v442
        %v617 = vpop.f32.mrb[0].mxu0
        %v618 = vadd.f32 0.0, %v617
        %v619 = vpop.f32.mrb[0].mxu0
        %v620 = vadd.f32 0.0, %v619
        %621 = vdwg.mxu0
        %v622 = vld [vmem:[%s5] sm:$0xf]
        %v624 = vlaneseq
        %v625 = vshrl.u32 %v624, 7
        %v626 = vsub.s32 0, %v625
        %v627 = vrot.slane %v622, %v626
        %v628 = vlaneseq
        %v629 = vshrl.u32 %v628, 7
        %v630 = vsub.s32 1, %v629
        %v631 = vrot.slane %v622, %v630
        %v632 = vlaneseq
        %v633 = vshrl.u32 %v632, 7
        %v634 = vsub.s32 2, %v633
        %v635 = vrot.slane %v622, %v634
        %v636 = vlaneseq
        %v637 = vshrl.u32 %v636, 7
        %v638 = vsub.s32 3, %v637
        %v639 = vrot.slane %v622, %v638
        %v644 = vadd.f32 %v511, %v627
        %v645 = vadd.f32 %v513, %v631
        %v646 = vadd.f32 %v600, %v635
        %v647 = vadd.f32 %v602, %v639
        %v648 = vadd.f32 %v517, %v627
        %v649 = vadd.f32 %v519, %v631
        %v650 = vadd.f32 %v606, %v635
        %v651 = vadd.f32 %v608, %v639
        %v652 = vadd.f32 %v523, %v627
        %v653 = vadd.f32 %v525, %v631
        %v654 = vadd.f32 %v612, %v635
        %v655 = vadd.f32 %v614, %v639
        %v656 = vadd.f32 %v529, %v627
        %v657 = vadd.f32 %v531, %v631
        %v658 = vadd.f32 %v618, %v635
        %v659 = vadd.f32 %v620, %v639
        %660 = vst [vmem:[#allocation4] sm:$0xff] %v644
        %661 = vst [vmem:[#allocation4 + $0x8] sm:$0xff] %v645
        %662 = vst [vmem:[#allocation4 + $0x10] sm:$0xff] %v646
        %663 = vst [vmem:[#allocation4 + $0x18] sm:$0xff] %v647
        %664 = vst [vmem:[#allocation4 + $0x20] sm:$0xff] %v648
        %665 = vst [vmem:[#allocation4 + $0x28] sm:$0xff] %v649
        %666 = vst [vmem:[#allocation4 + $0x30] sm:$0xff] %v650
        %667 = vst [vmem:[#allocation4 + $0x38] sm:$0xff] %v651
        %668 = vst [vmem:[#allocation4 + $0x40] sm:$0xff] %v652
        %669 = vst [vmem:[#allocation4 + $0x48] sm:$0xff] %v653
        %670 = vst [vmem:[#allocation4 + $0x50] sm:$0xff] %v654
        %671 = vst [vmem:[#allocation4 + $0x58] sm:$0xff] %v655
        %672 = vst [vmem:[#allocation4 + $0x60] sm:$0xff] %v656
        %673 = vst [vmem:[#allocation4 + $0x68] sm:$0xff] %v657
        %674 = vst [vmem:[#allocation4 + $0x70] sm:$0xff] %v658
        %675 = vst [vmem:[#allocation4 + $0x78] sm:$0xff] %v659
        %p676 = scmp.eq.s32.totalorder %s33, 0
        // Predicated region
        $region65: #{tpu_custom_call.1} parent=43 // pred_check
          %p677 = pneg %p676
        $region66: #{tpu_custom_call.1} parent=43 // pred_check_branch
          %679 = sbr.rel (%p677) target = $region68
        $region67: #{tpu_custom_call.1} parent=43 // pred_region
          %v680 = vld [vmem:[#allocation8] sm:$0xff]
          %681 = vst [vmem:[#allocation2] sm:$0xff] %v680
          %v682 = vld [vmem:[#allocation10] sm:$0xff]
          %683 = vst [vmem:[#allocation3] sm:$0xff] %v682
        $region68: #{tpu_custom_call.1} parent=43 // pred_fallthru
          _
        %v684 = vld [vmem:[#allocation2] sm:$0xff]
        %v685 = vld [vmem:[#allocation3] sm:$0xff]
        %s686 = scalar_lea.vmem [#allocation4], 96
        %v687 = vld [vmem:[%s686] sm:$0xff]
        %v688 = vld [vmem:[%s686 + $0x8] sm:$0xff]
        %v689 = vld [vmem:[%s686 + $0x10] sm:$0xff]
        %v690 = vld [vmem:[%s686 + $0x18] sm:$0xff]
        %v691 = vld [vmem:[#allocation13] sm:$0xff]
        %v692 = vld [vmem:[#allocation13 + $0x8] sm:$0xff]
        %v693 = vld [vmem:[#allocation13 + $0x10] sm:$0xff]
        %v694 = vld [vmem:[#allocation13 + $0x18] sm:$0xff]
        %v695 = vld [vmem:[#allocation13 + $0x20] sm:$0xff]
        %v696 = vld [vmem:[#allocation13 + $0x28] sm:$0xff]
        %v697 = vld [vmem:[#allocation13 + $0x30] sm:$0xff]
        %v698 = vld [vmem:[#allocation13 + $0x38] sm:$0xff]
        %v699 = vld [vmem:[#allocation13 + $0x40] sm:$0xff]
        %v700 = vld [vmem:[#allocation13 + $0x48] sm:$0xff]
        %v701 = vld [vmem:[#allocation13 + $0x50] sm:$0xff]
        %v702 = vld [vmem:[#allocation13 + $0x58] sm:$0xff]
        %v703 = vld [vmem:[#allocation13 + $0x60] sm:$0xff]
        %v704 = vld [vmem:[#allocation13 + $0x68] sm:$0xff]
        %v705 = vld [vmem:[#allocation13 + $0x70] sm:$0xff]
        %v706 = vld [vmem:[#allocation13 + $0x78] sm:$0xff]
        %v707 = vld [vmem:[#allocation13 + $0x80] sm:$0xff]
        %v708 = vld [vmem:[#allocation13 + $0x88] sm:$0xff]
        %v709 = vld [vmem:[#allocation13 + $0x90] sm:$0xff]
        %v710 = vld [vmem:[#allocation13 + $0x98] sm:$0xff]
        %v711 = vld [vmem:[#allocation13 + $0xa0] sm:$0xff]
        %v712 = vld [vmem:[#allocation13 + $0xa8] sm:$0xff]
        %v713 = vld [vmem:[#allocation13 + $0xb0] sm:$0xff]
        %v714 = vld [vmem:[#allocation13 + $0xb8] sm:$0xff]
        %v715 = vld [vmem:[#allocation13 + $0xc0] sm:$0xff]
        %v716 = vld [vmem:[#allocation13 + $0xc8] sm:$0xff]
        %v717 = vld [vmem:[#allocation13 + $0xd0] sm:$0xff]
        %v718 = vld [vmem:[#allocation13 + $0xd8] sm:$0xff]
        %v719 = vld [vmem:[#allocation13 + $0xe0] sm:$0xff]
        %v720 = vld [vmem:[#allocation13 + $0xe8] sm:$0xff]
        %v721 = vld [vmem:[#allocation13 + $0xf0] sm:$0xff]
        %v722 = vld [vmem:[#allocation13 + $0xf8] sm:$0xff]
        %v723 = vld [vmem:[#allocation13 + $0x100] sm:$0xff]
        %v724 = vld [vmem:[#allocation13 + $0x108] sm:$0xff]
        %v725 = vld [vmem:[#allocation13 + $0x110] sm:$0xff]
        %v726 = vld [vmem:[#allocation13 + $0x118] sm:$0xff]
        %v727 = vld [vmem:[#allocation13 + $0x120] sm:$0xff]
        %v728 = vld [vmem:[#allocation13 + $0x128] sm:$0xff]
        %v729 = vld [vmem:[#allocation13 + $0x130] sm:$0xff]
        %v730 = vld [vmem:[#allocation13 + $0x138] sm:$0xff]
        %v731 = vld [vmem:[#allocation13 + $0x140] sm:$0xff]
        %v732 = vld [vmem:[#allocation13 + $0x148] sm:$0xff]
        %v733 = vld [vmem:[#allocation13 + $0x150] sm:$0xff]
        %v734 = vld [vmem:[#allocation13 + $0x158] sm:$0xff]
        %v735 = vld [vmem:[#allocation13 + $0x160] sm:$0xff]
        %v736 = vld [vmem:[#allocation13 + $0x168] sm:$0xff]
        %v737 = vld [vmem:[#allocation13 + $0x170] sm:$0xff]
        %v738 = vld [vmem:[#allocation13 + $0x178] sm:$0xff]
        %v739 = vld [vmem:[#allocation13 + $0x180] sm:$0xff]
        %v740 = vld [vmem:[#allocation13 + $0x188] sm:$0xff]
        %v741 = vld [vmem:[#allocation13 + $0x190] sm:$0xff]
        %v742 = vld [vmem:[#allocation13 + $0x198] sm:$0xff]
        %v743 = vld [vmem:[#allocation13 + $0x1a0] sm:$0xff]
        %v744 = vld [vmem:[#allocation13 + $0x1a8] sm:$0xff]
        %v745 = vld [vmem:[#allocation13 + $0x1b0] sm:$0xff]
        %v746 = vld [vmem:[#allocation13 + $0x1b8] sm:$0xff]
        %v747 = vld [vmem:[#allocation13 + $0x1c0] sm:$0xff]
        %v748 = vld [vmem:[#allocation13 + $0x1c8] sm:$0xff]
        %v749 = vld [vmem:[#allocation13 + $0x1d0] sm:$0xff]
        %v750 = vld [vmem:[#allocation13 + $0x1d8] sm:$0xff]
        %v751 = vld [vmem:[#allocation13 + $0x1e0] sm:$0xff]
        %v752 = vld [vmem:[#allocation13 + $0x1e8] sm:$0xff]
        %v753 = vld [vmem:[#allocation13 + $0x1f0] sm:$0xff]
        %v754 = vld [vmem:[#allocation13 + $0x1f8] sm:$0xff]
        %755 = vmatprep.subr.mxu0 %v692
        %756 = vmatpush1.msra.mxu0 %v691
        %757 = vmatprep.subr.mxu0 %v696
        %758 = vmatpush1.msra.mxu0 %v695
        %759 = vmatprep.subr.mxu0 %v700
        %760 = vmatpush1.msra.mxu0 %v699
        %761 = vmatprep.subr.mxu0 %v704
        %762 = vmatpush1.msra.mxu0 %v703
        %763 = vmatprep.subr.mxu0 %v708
        %764 = vmatpush1.msra.mxu0 %v707
        %765 = vmatprep.subr.mxu0 %v712
        %766 = vmatpush1.msra.mxu0 %v711
        %767 = vmatprep.subr.mxu0 %v716
        %768 = vmatpush1.msra.mxu0 %v715
        %769 = vmatprep.subr.mxu0 %v720
        %770 = vmatpush1.msra.mxu0 %v719
        %771 = vmatprep.subr.mxu0 %v724
        %772 = vmatpush1.msra.mxu0 %v723
        %773 = vmatprep.subr.mxu0 %v728
        %774 = vmatpush1.msra.mxu0 %v727
        %775 = vmatprep.subr.mxu0 %v732
        %776 = vmatpush1.msra.mxu0 %v731
        %777 = vmatprep.subr.mxu0 %v736
        %778 = vmatpush1.msra.mxu0 %v735
        %779 = vmatprep.subr.mxu0 %v740
        %780 = vmatpush1.msra.mxu0 %v739
        %781 = vmatprep.subr.mxu0 %v744
        %782 = vmatpush1.msra.mxu0 %v743
        %783 = vmatprep.subr.mxu0 %v748
        %784 = vmatpush1.msra.mxu0 %v747
        %785 = vmatprep.subr.mxu0 %v752
        %786 = vmatpush1.msra.mxu0 %v751
        %787 = vmatprep.subr.mxu0 0.0
        %788 = vmatpush1.msra.mxu0 0.0
        %789 = vmatprep.subr.mxu0 0.0
        %790 = vmatpush1.msra.mxu0 0.0
        %791 = vmatprep.subr.mxu0 0.0
        %792 = vmatpush1.msra.mxu0 0.0
        %793 = vmatprep.subr.mxu0 0.0
        %794 = vmatpush1.msra.mxu0 0.0
        %795 = vmatprep.subr.mxu0 0.0
        %796 = vmatpush1.msra.mxu0 0.0
        %797 = vmatprep.subr.mxu0 0.0
        %798 = vmatpush1.msra.mxu0 0.0
        %799 = vmatprep.subr.mxu0 0.0
        %800 = vmatpush1.msra.mxu0 0.0
        %801 = vmatprep.subr.mxu0 0.0
        %802 = vmatpush1.msra.mxu0 0.0
        %803 = vmatprep.subr.mxu0 0.0
        %804 = vmatpush1.msra.mxu0 0.0
        %805 = vmatprep.subr.mxu0 0.0
        %806 = vmatpush1.msra.mxu0 0.0
        %807 = vmatprep.subr.mxu0 0.0
        %808 = vmatpush1.msra.mxu0 0.0
        %809 = vmatprep.subr.mxu0 0.0
        %810 = vmatpush1.msra.mxu0 0.0
        %811 = vmatprep.subr.mxu0 0.0
        %812 = vmatpush1.msra.mxu0 0.0
        %813 = vmatprep.subr.mxu0 0.0
        %814 = vmatpush1.msra.mxu0 0.0
        %815 = vmatprep.subr.mxu0 0.0
        %816 = vmatpush1.msra.mxu0 0.0
        %817 = vmatprep.subr.mxu0 0.0
        %818 = vmatpush1.msra.mxu0 0.0
        %819 = vmatprep.mubr.f32.mxu0 0.0
        %820 = vmatmul.mubr.f32.gmra.mrb[0].mxu0 %v684
        %v821 = vpop.f32.mrb[0].mxu0
        %v822 = vadd.f32 0.0, %v821
        %v823 = vpop.f32.mrb[0].mxu0
        %v824 = vadd.f32 0.0, %v823
        %825 = vdwg.mxu0
        %826 = vmatprep.subr.mxu0 %v694
        %827 = vmatpush1.msra.mxu0 %v693
        %828 = vmatprep.subr.mxu0 %v698
        %829 = vmatpush1.msra.mxu0 %v697
        %830 = vmatprep.subr.mxu0 %v702
        %831 = vmatpush1.msra.mxu0 %v701
        %832 = vmatprep.subr.mxu0 %v706
        %833 = vmatpush1.msra.mxu0 %v705
        %834 = vmatprep.subr.mxu0 %v710
        %835 = vmatpush1.msra.mxu0 %v709
        %836 = vmatprep.subr.mxu0 %v714
        %837 = vmatpush1.msra.mxu0 %v713
        %838 = vmatprep.subr.mxu0 %v718
        %839 = vmatpush1.msra.mxu0 %v717
        %840 = vmatprep.subr.mxu0 %v722
        %841 = vmatpush1.msra.mxu0 %v721
        %842 = vmatprep.subr.mxu0 %v726
        %843 = vmatpush1.msra.mxu0 %v725
        %844 = vmatprep.subr.mxu0 %v730
        %845 = vmatpush1.msra.mxu0 %v729
        %846 = vmatprep.subr.mxu0 %v734
        %847 = vmatpush1.msra.mxu0 %v733
        %848 = vmatprep.subr.mxu0 %v738
        %849 = vmatpush1.msra.mxu0 %v737
        %850 = vmatprep.subr.mxu0 %v742
        %851 = vmatpush1.msra.mxu0 %v741
        %852 = vmatprep.subr.mxu0 %v746
        %853 = vmatpush1.msra.mxu0 %v745
        %854 = vmatprep.subr.mxu0 %v750
        %855 = vmatpush1.msra.mxu0 %v749
        %856 = vmatprep.subr.mxu0 %v754
        %857 = vmatpush1.msra.mxu0 %v753
        %858 = vmatprep.subr.mxu0 0.0
        %859 = vmatpush1.msra.mxu0 0.0
        %860 = vmatprep.subr.mxu0 0.0
        %861 = vmatpush1.msra.mxu0 0.0
        %862 = vmatprep.subr.mxu0 0.0
        %863 = vmatpush1.msra.mxu0 0.0
        %864 = vmatprep.subr.mxu0 0.0
        %865 = vmatpush1.msra.mxu0 0.0
        %866 = vmatprep.subr.mxu0 0.0
        %867 = vmatpush1.msra.mxu0 0.0
        %868 = vmatprep.subr.mxu0 0.0
        %869 = vmatpush1.msra.mxu0 0.0
        %870 = vmatprep.subr.mxu0 0.0
        %871 = vmatpush1.msra.mxu0 0.0
        %872 = vmatprep.subr.mxu0 0.0
        %873 = vmatpush1.msra.mxu0 0.0
        %874 = vmatprep.subr.mxu0 0.0
        %875 = vmatpush1.msra.mxu0 0.0
        %876 = vmatprep.subr.mxu0 0.0
        %877 = vmatpush1.msra.mxu0 0.0
        %878 = vmatprep.subr.mxu0 0.0
        %879 = vmatpush1.msra.mxu0 0.0
        %880 = vmatprep.subr.mxu0 0.0
        %881 = vmatpush1.msra.mxu0 0.0
        %882 = vmatprep.subr.mxu0 0.0
        %883 = vmatpush1.msra.mxu0 0.0
        %884 = vmatprep.subr.mxu0 0.0
        %885 = vmatpush1.msra.mxu0 0.0
        %886 = vmatprep.subr.mxu0 0.0
        %887 = vmatpush1.msra.mxu0 0.0
        %888 = vmatprep.subr.mxu0 0.0
        %889 = vmatpush1.msra.mxu0 0.0
        %890 = vmatprep.mubr.f32.mxu0 0.0
        %891 = vmatmul.mubr.f32.gmra.mrb[0].mxu0 %v684
        %v892 = vpop.f32.mrb[0].mxu0
        %v893 = vadd.f32 0.0, %v892
        %v894 = vpop.f32.mrb[0].mxu0
        %v895 = vadd.f32 0.0, %v894
        %896 = vdwg.mxu0
        %v897 = vadd.f32 %v687, %v822
        %v898 = vadd.f32 %v688, %v824
        %v899 = vadd.f32 %v689, %v893
        %v900 = vadd.f32 %v690, %v895
        %v901 = vmul.f32 %v897, 0.5
        %v902 = vmul.f32 %v898, 0.5
        %v903 = vmul.f32 %v899, 0.5
        %v904 = vtanh.pop %v901
        %v905 = vtanh.pop %v902
        %v906 = vtanh.pop %v903
        %v907 = vmul.f32 %v904, 0.5
        %v908 = vmul.f32 %v905, 0.5
        %v909 = vmul.f32 %v906, 0.5
        %v910 = vadd.f32 %v907, 0.5
        %v911 = vadd.f32 %v908, 0.5
        %v912 = vadd.f32 %v909, 0.5
        %v913 = vtanh.pop %v900
        %v914 = vmul.f32 %v911, %v685
        %v915 = vmul.f32 %v910, %v913
        %v916 = vadd.f32 %v914, %v915
        %v917 = vtanh.pop %v916
        %v918 = vmul.f32 %v912, %v917
        %s919 = scalar_lea.vmem %s388, 24 [#allocation14]
        %920 = vst [vmem:[%s919] sm:$0xff] %v918
        %s921 = scalar_lea.vmem [#allocation4], 64
        %v922 = vld [vmem:[%s921] sm:$0xff]
        %v923 = vld [vmem:[%s921 + $0x8] sm:$0xff]
        %v924 = vld [vmem:[%s921 + $0x10] sm:$0xff]
        %v925 = vld [vmem:[%s921 + $0x18] sm:$0xff]
        %v926 = vld [vmem:[#allocation13] sm:$0xff]
        %v927 = vld [vmem:[#allocation13 + $0x8] sm:$0xff]
        %v928 = vld [vmem:[#allocation13 + $0x10] sm:$0xff]
        %v929 = vld [vmem:[#allocation13 + $0x18] sm:$0xff]
        %v930 = vld [vmem:[#allocation13 + $0x20] sm:$0xff]
        %v931 = vld [vmem:[#allocation13 + $0x28] sm:$0xff]
        %v932 = vld [vmem:[#allocation13 + $0x30] sm:$0xff]
        %v933 = vld [vmem:[#allocation13 + $0x38] sm:$0xff]
        %v934 = vld [vmem:[#allocation13 + $0x40] sm:$0xff]
        %v935 = vld [vmem:[#allocation13 + $0x48] sm:$0xff]
        %v936 = vld [vmem:[#allocation13 + $0x50] sm:$0xff]
        %v937 = vld [vmem:[#allocation13 + $0x58] sm:$0xff]
        %v938 = vld [vmem:[#allocation13 + $0x60] sm:$0xff]
        %v939 = vld [vmem:[#allocation13 + $0x68] sm:$0xff]
        %v940 = vld [vmem:[#allocation13 + $0x70] sm:$0xff]
        %v941 = vld [vmem:[#allocation13 + $0x78] sm:$0xff]
        %v942 = vld [vmem:[#allocation13 + $0x80] sm:$0xff]
        %v943 = vld [vmem:[#allocation13 + $0x88] sm:$0xff]
        %v944 = vld [vmem:[#allocation13 + $0x90] sm:$0xff]
        %v945 = vld [vmem:[#allocation13 + $0x98] sm:$0xff]
        %v946 = vld [vmem:[#allocation13 + $0xa0] sm:$0xff]
        %v947 = vld [vmem:[#allocation13 + $0xa8] sm:$0xff]
        %v948 = vld [vmem:[#allocation13 + $0xb0] sm:$0xff]
        %v949 = vld [vmem:[#allocation13 + $0xb8] sm:$0xff]
        %v950 = vld [vmem:[#allocation13 + $0xc0] sm:$0xff]
        %v951 = vld [vmem:[#allocation13 + $0xc8] sm:$0xff]
        %v952 = vld [vmem:[#allocation13 + $0xd0] sm:$0xff]
        %v953 = vld [vmem:[#allocation13 + $0xd8] sm:$0xff]
        %v954 = vld [vmem:[#allocation13 + $0xe0] sm:$0xff]
        %v955 = vld [vmem:[#allocation13 + $0xe8] sm:$0xff]
        %v956 = vld [vmem:[#allocation13 + $0xf0] sm:$0xff]
        %v957 = vld [vmem:[#allocation13 + $0xf8] sm:$0xff]
        %v958 = vld [vmem:[#allocation13 + $0x100] sm:$0xff]
        %v959 = vld [vmem:[#allocation13 + $0x108] sm:$0xff]
        %v960 = vld [vmem:[#allocation13 + $0x110] sm:$0xff]
        %v961 = vld [vmem:[#allocation13 + $0x118] sm:$0xff]
        %v962 = vld [vmem:[#allocation13 + $0x120] sm:$0xff]
        %v963 = vld [vmem:[#allocation13 + $0x128] sm:$0xff]
        %v964 = vld [vmem:[#allocation13 + $0x130] sm:$0xff]
        %v965 = vld [vmem:[#allocation13 + $0x138] sm:$0xff]
        %v966 = vld [vmem:[#allocation13 + $0x140] sm:$0xff]
        %v967 = vld [vmem:[#allocation13 + $0x148] sm:$0xff]
        %v968 = vld [vmem:[#allocation13 + $0x150] sm:$0xff]
        %v969 = vld [vmem:[#allocation13 + $0x158] sm:$0xff]
        %v970 = vld [vmem:[#allocation13 + $0x160] sm:$0xff]
        %v971 = vld [vmem:[#allocation13 + $0x168] sm:$0xff]
        %v972 = vld [vmem:[#allocation13 + $0x170] sm:$0xff]
        %v973 = vld [vmem:[#allocation13 + $0x178] sm:$0xff]
        %v974 = vld [vmem:[#allocation13 + $0x180] sm:$0xff]
        %v975 = vld [vmem:[#allocation13 + $0x188] sm:$0xff]
        %v976 = vld [vmem:[#allocation13 + $0x190] sm:$0xff]
        %v977 = vld [vmem:[#allocation13 + $0x198] sm:$0xff]
        %v978 = vld [vmem:[#allocation13 + $0x1a0] sm:$0xff]
        %v979 = vld [vmem:[#allocation13 + $0x1a8] sm:$0xff]
        %v980 = vld [vmem:[#allocation13 + $0x1b0] sm:$0xff]
        %v981 = vld [vmem:[#allocation13 + $0x1b8] sm:$0xff]
        %v982 = vld [vmem:[#allocation13 + $0x1c0] sm:$0xff]
        %v983 = vld [vmem:[#allocation13 + $0x1c8] sm:$0xff]
        %v984 = vld [vmem:[#allocation13 + $0x1d0] sm:$0xff]
        %v985 = vld [vmem:[#allocation13 + $0x1d8] sm:$0xff]
        %v986 = vld [vmem:[#allocation13 + $0x1e0] sm:$0xff]
        %v987 = vld [vmem:[#allocation13 + $0x1e8] sm:$0xff]
        %v988 = vld [vmem:[#allocation13 + $0x1f0] sm:$0xff]
        %v989 = vld [vmem:[#allocation13 + $0x1f8] sm:$0xff]
        %990 = vmatprep.subr.mxu0 %v927
        %991 = vmatpush1.msra.mxu0 %v926
        %992 = vmatprep.subr.mxu0 %v931
        %993 = vmatpush1.msra.mxu0 %v930
        %994 = vmatprep.subr.mxu0 %v935
        %995 = vmatpush1.msra.mxu0 %v934
        %996 = vmatprep.subr.mxu0 %v939
        %997 = vmatpush1.msra.mxu0 %v938
        %998 = vmatprep.subr.mxu0 %v943
        %999 = vmatpush1.msra.mxu0 %v942
        %1000 = vmatprep.subr.mxu0 %v947
        %1001 = vmatpush1.msra.mxu0 %v946
        %1002 = vmatprep.subr.mxu0 %v951
        %1003 = vmatpush1.msra.mxu0 %v950
        %1004 = vmatprep.subr.mxu0 %v955
        %1005 = vmatpush1.msra.mxu0 %v954
        %1006 = vmatprep.subr.mxu0 %v959
        %1007 = vmatpush1.msra.mxu0 %v958
        %1008 = vmatprep.subr.mxu0 %v963
        %1009 = vmatpush1.msra.mxu0 %v962
        %1010 = vmatprep.subr.mxu0 %v967
        %1011 = vmatpush1.msra.mxu0 %v966
        %1012 = vmatprep.subr.mxu0 %v971
        %1013 = vmatpush1.msra.mxu0 %v970
        %1014 = vmatprep.subr.mxu0 %v975
        %1015 = vmatpush1.msra.mxu0 %v974
        %1016 = vmatprep.subr.mxu0 %v979
        %1017 = vmatpush1.msra.mxu0 %v978
        %1018 = vmatprep.subr.mxu0 %v983
        %1019 = vmatpush1.msra.mxu0 %v982
        %1020 = vmatprep.subr.mxu0 %v987
        %1021 = vmatpush1.msra.mxu0 %v986
        %1022 = vmatprep.subr.mxu0 0.0
        %1023 = vmatpush1.msra.mxu0 0.0
        %1024 = vmatprep.subr.mxu0 0.0
        %1025 = vmatpush1.msra.mxu0 0.0
        %1026 = vmatprep.subr.mxu0 0.0
        %1027 = vmatpush1.msra.mxu0 0.0
        %1028 = vmatprep.subr.mxu0 0.0
        %1029 = vmatpush1.msra.mxu0 0.0
        %1030 = vmatprep.subr.mxu0 0.0
        %1031 = vmatpush1.msra.mxu0 0.0
        %1032 = vmatprep.subr.mxu0 0.0
        %1033 = vmatpush1.msra.mxu0 0.0
        %1034 = vmatprep.subr.mxu0 0.0
        %1035 = vmatpush1.msra.mxu0 0.0
        %1036 = vmatprep.subr.mxu0 0.0
        %1037 = vmatpush1.msra.mxu0 0.0
        %1038 = vmatprep.subr.mxu0 0.0
        %1039 = vmatpush1.msra.mxu0 0.0
        %1040 = vmatprep.subr.mxu0 0.0
        %1041 = vmatpush1.msra.mxu0 0.0
        %1042 = vmatprep.subr.mxu0 0.0
        %1043 = vmatpush1.msra.mxu0 0.0
        %1044 = vmatprep.subr.mxu0 0.0
        %1045 = vmatpush1.msra.mxu0 0.0
        %1046 = vmatprep.subr.mxu0 0.0
        %1047 = vmatpush1.msra.mxu0 0.0
        %1048 = vmatprep.subr.mxu0 0.0
        %1049 = vmatpush1.msra.mxu0 0.0
        %1050 = vmatprep.subr.mxu0 0.0
        %1051 = vmatpush1.msra.mxu0 0.0
        %1052 = vmatprep.subr.mxu0 0.0
        %1053 = vmatpush1.msra.mxu0 0.0
        %1054 = vmatprep.mubr.f32.mxu0 0.0
        %1055 = vmatmul.mubr.f32.gmra.mrb[0].mxu0 %v918
        %v1056 = vpop.f32.mrb[0].mxu0
        %v1057 = vadd.f32 0.0, %v1056
        %v1058 = vpop.f32.mrb[0].mxu0
        %v1059 = vadd.f32 0.0, %v1058
        %1060 = vdwg.mxu0
        %1061 = vmatprep.subr.mxu0 %v929
        %1062 = vmatpush1.msra.mxu0 %v928
        %1063 = vmatprep.subr.mxu0 %v933
        %1064 = vmatpush1.msra.mxu0 %v932
        %1065 = vmatprep.subr.mxu0 %v937
        %1066 = vmatpush1.msra.mxu0 %v936
        %1067 = vmatprep.subr.mxu0 %v941
        %1068 = vmatpush1.msra.mxu0 %v940
        %1069 = vmatprep.subr.mxu0 %v945
        %1070 = vmatpush1.msra.mxu0 %v944
        %1071 = vmatprep.subr.mxu0 %v949
        %1072 = vmatpush1.msra.mxu0 %v948
        %1073 = vmatprep.subr.mxu0 %v953
        %1074 = vmatpush1.msra.mxu0 %v952
        %1075 = vmatprep.subr.mxu0 %v957
        %1076 = vmatpush1.msra.mxu0 %v956
        %1077 = vmatprep.subr.mxu0 %v961
        %1078 = vmatpush1.msra.mxu0 %v960
        %1079 = vmatprep.subr.mxu0 %v965
        %1080 = vmatpush1.msra.mxu0 %v964
        %1081 = vmatprep.subr.mxu0 %v969
        %1082 = vmatpush1.msra.mxu0 %v968
        %1083 = vmatprep.subr.mxu0 %v973
        %1084 = vmatpush1.msra.mxu0 %v972
        %1085 = vmatprep.subr.mxu0 %v977
        %1086 = vmatpush1.msra.mxu0 %v976
        %1087 = vmatprep.subr.mxu0 %v981
        %1088 = vmatpush1.msra.mxu0 %v980
        %1089 = vmatprep.subr.mxu0 %v985
        %1090 = vmatpush1.msra.mxu0 %v984
        %1091 = vmatprep.subr.mxu0 %v989
        %1092 = vmatpush1.msra.mxu0 %v988
        %1093 = vmatprep.subr.mxu0 0.0
        %1094 = vmatpush1.msra.mxu0 0.0
        %1095 = vmatprep.subr.mxu0 0.0
        %1096 = vmatpush1.msra.mxu0 0.0
        %1097 = vmatprep.subr.mxu0 0.0
        %1098 = vmatpush1.msra.mxu0 0.0
        %1099 = vmatprep.subr.mxu0 0.0
        %1100 = vmatpush1.msra.mxu0 0.0
        %1101 = vmatprep.subr.mxu0 0.0
        %1102 = vmatpush1.msra.mxu0 0.0
        %1103 = vmatprep.subr.mxu0 0.0
        %1104 = vmatpush1.msra.mxu0 0.0
        %1105 = vmatprep.subr.mxu0 0.0
        %1106 = vmatpush1.msra.mxu0 0.0
        %1107 = vmatprep.subr.mxu0 0.0
        %1108 = vmatpush1.msra.mxu0 0.0
        %1109 = vmatprep.subr.mxu0 0.0
        %1110 = vmatpush1.msra.mxu0 0.0
        %1111 = vmatprep.subr.mxu0 0.0
        %1112 = vmatpush1.msra.mxu0 0.0
        %1113 = vmatprep.subr.mxu0 0.0
        %1114 = vmatpush1.msra.mxu0 0.0
        %1115 = vmatprep.subr.mxu0 0.0
        %1116 = vmatpush1.msra.mxu0 0.0
        %1117 = vmatprep.subr.mxu0 0.0
        %1118 = vmatpush1.msra.mxu0 0.0
        %1119 = vmatprep.subr.mxu0 0.0
        %1120 = vmatpush1.msra.mxu0 0.0
        %1121 = vmatprep.subr.mxu0 0.0
        %1122 = vmatpush1.msra.mxu0 0.0
        %1123 = vmatprep.subr.mxu0 0.0
        %1124 = vmatpush1.msra.mxu0 0.0
        %1125 = vmatprep.mubr.f32.mxu0 0.0
        %1126 = vmatmul.mubr.f32.gmra.mrb[0].mxu0 %v918
        %v1127 = vpop.f32.mrb[0].mxu0
        %v1128 = vadd.f32 0.0, %v1127
        %v1129 = vpop.f32.mrb[0].mxu0
        %v1130 = vadd.f32 0.0, %v1129
        %1131 = vdwg.mxu0
        %v1132 = vadd.f32 %v922, %v1057
        %v1133 = vadd.f32 %v923, %v1059
        %v1134 = vadd.f32 %v924, %v1128
        %v1135 = vadd.f32 %v925, %v1130
        %v1136 = vmul.f32 %v1132, 0.5
        %v1137 = vmul.f32 %v1133, 0.5
        %v1138 = vmul.f32 %v1134, 0.5
        %v1139 = vtanh.pop %v1136
        %v1140 = vtanh.pop %v1137
        %v1141 = vtanh.pop %v1138
        %v1142 = vmul.f32 %v1139, 0.5
        %v1143 = vmul.f32 %v1140, 0.5
        %v1144 = vmul.f32 %v1141, 0.5
        %v1145 = vadd.f32 %v1142, 0.5
        %v1146 = vadd.f32 %v1143, 0.5
        %v1147 = vadd.f32 %v1144, 0.5
        %v1148 = vtanh.pop %v1135
        %v1149 = vmul.f32 %v1146, %v916
        %v1150 = vmul.f32 %v1145, %v1148
        %v1151 = vadd.f32 %v1149, %v1150
        %v1152 = vtanh.pop %v1151
        %v1153 = vmul.f32 %v1147, %v1152
        %s1154 = scalar_lea.vmem %s388, 16 [#allocation14]
        %1155 = vst [vmem:[%s1154] sm:$0xff] %v1153
        %s1156 = scalar_lea.vmem [#allocation4], 32
        %v1157 = vld [vmem:[%s1156] sm:$0xff]
        %v1158 = vld [vmem:[%s1156 + $0x8] sm:$0xff]
        %v1159 = vld [vmem:[%s1156 + $0x10] sm:$0xff]
        %v1160 = vld [vmem:[%s1156 + $0x18] sm:$0xff]
        %v1161 = vld [vmem:[#allocation13] sm:$0xff]
        %v1162 = vld [vmem:[#allocation13 + $0x8] sm:$0xff]
        %v1163 = vld [vmem:[#allocation13 + $0x10] sm:$0xff]
        %v1164 = vld [vmem:[#allocation13 + $0x18] sm:$0xff]
        %v1165 = vld [vmem:[#allocation13 + $0x20] sm:$0xff]
        %v1166 = vld [vmem:[#allocation13 + $0x28] sm:$0xff]
        %v1167 = vld [vmem:[#allocation13 + $0x30] sm:$0xff]
        %v1168 = vld [vmem:[#allocation13 + $0x38] sm:$0xff]
        %v1169 = vld [vmem:[#allocation13 + $0x40] sm:$0xff]
        %v1170 = vld [vmem:[#allocation13 + $0x48] sm:$0xff]
        %v1171 = vld [vmem:[#allocation13 + $0x50] sm:$0xff]
        %v1172 = vld [vmem:[#allocation13 + $0x58] sm:$0xff]
        %v1173 = vld [vmem:[#allocation13 + $0x60] sm:$0xff]
        %v1174 = vld [vmem:[#allocation13 + $0x68] sm:$0xff]
        %v1175 = vld [vmem:[#allocation13 + $0x70] sm:$0xff]
        %v1176 = vld [vmem:[#allocation13 + $0x78] sm:$0xff]
        %v1177 = vld [vmem:[#allocation13 + $0x80] sm:$0xff]
        %v1178 = vld [vmem:[#allocation13 + $0x88] sm:$0xff]
        %v1179 = vld [vmem:[#allocation13 + $0x90] sm:$0xff]
        %v1180 = vld [vmem:[#allocation13 + $0x98] sm:$0xff]
        %v1181 = vld [vmem:[#allocation13 + $0xa0] sm:$0xff]
        %v1182 = vld [vmem:[#allocation13 + $0xa8] sm:$0xff]
        %v1183 = vld [vmem:[#allocation13 + $0xb0] sm:$0xff]
        %v1184 = vld [vmem:[#allocation13 + $0xb8] sm:$0xff]
        %v1185 = vld [vmem:[#allocation13 + $0xc0] sm:$0xff]
        %v1186 = vld [vmem:[#allocation13 + $0xc8] sm:$0xff]
        %v1187 = vld [vmem:[#allocation13 + $0xd0] sm:$0xff]
        %v1188 = vld [vmem:[#allocation13 + $0xd8] sm:$0xff]
        %v1189 = vld [vmem:[#allocation13 + $0xe0] sm:$0xff]
        %v1190 = vld [vmem:[#allocation13 + $0xe8] sm:$0xff]
        %v1191 = vld [vmem:[#allocation13 + $0xf0] sm:$0xff]
        %v1192 = vld [vmem:[#allocation13 + $0xf8] sm:$0xff]
        %v1193 = vld [vmem:[#allocation13 + $0x100] sm:$0xff]
        %v1194 = vld [vmem:[#allocation13 + $0x108] sm:$0xff]
        %v1195 = vld [vmem:[#allocation13 + $0x110] sm:$0xff]
        %v1196 = vld [vmem:[#allocation13 + $0x118] sm:$0xff]
        %v1197 = vld [vmem:[#allocation13 + $0x120] sm:$0xff]
        %v1198 = vld [vmem:[#allocation13 + $0x128] sm:$0xff]
        %v1199 = vld [vmem:[#allocation13 + $0x130] sm:$0xff]
        %v1200 = vld [vmem:[#allocation13 + $0x138] sm:$0xff]
        %v1201 = vld [vmem:[#allocation13 + $0x140] sm:$0xff]
        %v1202 = vld [vmem:[#allocation13 + $0x148] sm:$0xff]
        %v1203 = vld [vmem:[#allocation13 + $0x150] sm:$0xff]
        %v1204 = vld [vmem:[#allocation13 + $0x158] sm:$0xff]
        %v1205 = vld [vmem:[#allocation13 + $0x160] sm:$0xff]
        %v1206 = vld [vmem:[#allocation13 + $0x168] sm:$0xff]
        %v1207 = vld [vmem:[#allocation13 + $0x170] sm:$0xff]
        %v1208 = vld [vmem:[#allocation13 + $0x178] sm:$0xff]
        %v1209 = vld [vmem:[#allocation13 + $0x180] sm:$0xff]
        %v1210 = vld [vmem:[#allocation13 + $0x188] sm:$0xff]
        %v1211 = vld [vmem:[#allocation13 + $0x190] sm:$0xff]
        %v1212 = vld [vmem:[#allocation13 + $0x198] sm:$0xff]
        %v1213 = vld [vmem:[#allocation13 + $0x1a0] sm:$0xff]
        %v1214 = vld [vmem:[#allocation13 + $0x1a8] sm:$0xff]
        %v1215 = vld [vmem:[#allocation13 + $0x1b0] sm:$0xff]
        %v1216 = vld [vmem:[#allocation13 + $0x1b8] sm:$0xff]
        %v1217 = vld [vmem:[#allocation13 + $0x1c0] sm:$0xff]
        %v1218 = vld [vmem:[#allocation13 + $0x1c8] sm:$0xff]
        %v1219 = vld [vmem:[#allocation13 + $0x1d0] sm:$0xff]
        %v1220 = vld [vmem:[#allocation13 + $0x1d8] sm:$0xff]
        %v1221 = vld [vmem:[#allocation13 + $0x1e0] sm:$0xff]
        %v1222 = vld [vmem:[#allocation13 + $0x1e8] sm:$0xff]
        %v1223 = vld [vmem:[#allocation13 + $0x1f0] sm:$0xff]
        %v1224 = vld [vmem:[#allocation13 + $0x1f8] sm:$0xff]
        %1225 = vmatprep.subr.mxu0 %v1162
        %1226 = vmatpush1.msra.mxu0 %v1161
        %1227 = vmatprep.subr.mxu0 %v1166
        %1228 = vmatpush1.msra.mxu0 %v1165
        %1229 = vmatprep.subr.mxu0 %v1170
        %1230 = vmatpush1.msra.mxu0 %v1169
        %1231 = vmatprep.subr.mxu0 %v1174
        %1232 = vmatpush1.msra.mxu0 %v1173
        %1233 = vmatprep.subr.mxu0 %v1178
        %1234 = vmatpush1.msra.mxu0 %v1177
        %1235 = vmatprep.subr.mxu0 %v1182
        %1236 = vmatpush1.msra.mxu0 %v1181
        %1237 = vmatprep.subr.mxu0 %v1186
        %1238 = vmatpush1.msra.mxu0 %v1185
        %1239 = vmatprep.subr.mxu0 %v1190
        %1240 = vmatpush1.msra.mxu0 %v1189
        %1241 = vmatprep.subr.mxu0 %v1194
        %1242 = vmatpush1.msra.mxu0 %v1193
        %1243 = vmatprep.subr.mxu0 %v1198
        %1244 = vmatpush1.msra.mxu0 %v1197
        %1245 = vmatprep.subr.mxu0 %v1202
        %1246 = vmatpush1.msra.mxu0 %v1201
        %1247 = vmatprep.subr.mxu0 %v1206
        %1248 = vmatpush1.msra.mxu0 %v1205
        %1249 = vmatprep.subr.mxu0 %v1210
        %1250 = vmatpush1.msra.mxu0 %v1209
        %1251 = vmatprep.subr.mxu0 %v1214
        %1252 = vmatpush1.msra.mxu0 %v1213
        %1253 = vmatprep.subr.mxu0 %v1218
        %1254 = vmatpush1.msra.mxu0 %v1217
        %1255 = vmatprep.subr.mxu0 %v1222
        %1256 = vmatpush1.msra.mxu0 %v1221
        %1257 = vmatprep.subr.mxu0 0.0
        %1258 = vmatpush1.msra.mxu0 0.0
        %1259 = vmatprep.subr.mxu0 0.0
        %1260 = vmatpush1.msra.mxu0 0.0
        %1261 = vmatprep.subr.mxu0 0.0
        %1262 = vmatpush1.msra.mxu0 0.0
        %1263 = vmatprep.subr.mxu0 0.0
        %1264 = vmatpush1.msra.mxu0 0.0
        %1265 = vmatprep.subr.mxu0 0.0
        %1266 = vmatpush1.msra.mxu0 0.0
        %1267 = vmatprep.subr.mxu0 0.0
        %1268 = vmatpush1.msra.mxu0 0.0
        %1269 = vmatprep.subr.mxu0 0.0
        %1270 = vmatpush1.msra.mxu0 0.0
        %1271 = vmatprep.subr.mxu0 0.0
        %1272 = vmatpush1.msra.mxu0 0.0
        %1273 = vmatprep.subr.mxu0 0.0
        %1274 = vmatpush1.msra.mxu0 0.0
        %1275 = vmatprep.subr.mxu0 0.0
        %1276 = vmatpush1.msra.mxu0 0.0
        %1277 = vmatprep.subr.mxu0 0.0
        %1278 = vmatpush1.msra.mxu0 0.0
        %1279 = vmatprep.subr.mxu0 0.0
        %1280 = vmatpush1.msra.mxu0 0.0
        %1281 = vmatprep.subr.mxu0 0.0
        %1282 = vmatpush1.msra.mxu0 0.0
        %1283 = vmatprep.subr.mxu0 0.0
        %1284 = vmatpush1.msra.mxu0 0.0
        %1285 = vmatprep.subr.mxu0 0.0
        %1286 = vmatpush1.msra.mxu0 0.0
        %1287 = vmatprep.subr.mxu0 0.0
        %1288 = vmatpush1.msra.mxu0 0.0
        %1289 = vmatprep.mubr.f32.mxu0 0.0
        %1290 = vmatmul.mubr.f32.gmra.mrb[0].mxu0 %v1153
        %v1291 = vpop.f32.mrb[0].mxu0
        %v1292 = vadd.f32 0.0, %v1291
        %v1293 = vpop.f32.mrb[0].mxu0
        %v1294 = vadd.f32 0.0, %v1293
        %1295 = vdwg.mxu0
        %1296 = vmatprep.subr.mxu0 %v1164
        %1297 = vmatpush1.msra.mxu0 %v1163
        %1298 = vmatprep.subr.mxu0 %v1168
        %1299 = vmatpush1.msra.mxu0 %v1167
        %1300 = vmatprep.subr.mxu0 %v1172
        %1301 = vmatpush1.msra.mxu0 %v1171
        %1302 = vmatprep.subr.mxu0 %v1176
        %1303 = vmatpush1.msra.mxu0 %v1175
        %1304 = vmatprep.subr.mxu0 %v1180
        %1305 = vmatpush1.msra.mxu0 %v1179
        %1306 = vmatprep.subr.mxu0 %v1184
        %1307 = vmatpush1.msra.mxu0 %v1183
        %1308 = vmatprep.subr.mxu0 %v1188
        %1309 = vmatpush1.msra.mxu0 %v1187
        %1310 = vmatprep.subr.mxu0 %v1192
        %1311 = vmatpush1.msra.mxu0 %v1191
        %1312 = vmatprep.subr.mxu0 %v1196
        %1313 = vmatpush1.msra.mxu0 %v1195
        %1314 = vmatprep.subr.mxu0 %v1200
        %1315 = vmatpush1.msra.mxu0 %v1199
        %1316 = vmatprep.subr.mxu0 %v1204
        %1317 = vmatpush1.msra.mxu0 %v1203
        %1318 = vmatprep.subr.mxu0 %v1208
        %1319 = vmatpush1.msra.mxu0 %v1207
        %1320 = vmatprep.subr.mxu0 %v1212
        %1321 = vmatpush1.msra.mxu0 %v1211
        %1322 = vmatprep.subr.mxu0 %v1216
        %1323 = vmatpush1.msra.mxu0 %v1215
        %1324 = vmatprep.subr.mxu0 %v1220
        %1325 = vmatpush1.msra.mxu0 %v1219
        %1326 = vmatprep.subr.mxu0 %v1224
        %1327 = vmatpush1.msra.mxu0 %v1223
        %1328 = vmatprep.subr.mxu0 0.0
        %1329 = vmatpush1.msra.mxu0 0.0
        %1330 = vmatprep.subr.mxu0 0.0
        %1331 = vmatpush1.msra.mxu0 0.0
        %1332 = vmatprep.subr.mxu0 0.0
        %1333 = vmatpush1.msra.mxu0 0.0
        %1334 = vmatprep.subr.mxu0 0.0
        %1335 = vmatpush1.msra.mxu0 0.0
        %1336 = vmatprep.subr.mxu0 0.0
        %1337 = vmatpush1.msra.mxu0 0.0
        %1338 = vmatprep.subr.mxu0 0.0
        %1339 = vmatpush1.msra.mxu0 0.0
        %1340 = vmatprep.subr.mxu0 0.0
        %1341 = vmatpush1.msra.mxu0 0.0
        %1342 = vmatprep.subr.mxu0 0.0
        %1343 = vmatpush1.msra.mxu0 0.0
        %1344 = vmatprep.subr.mxu0 0.0
        %1345 = vmatpush1.msra.mxu0 0.0
        %1346 = vmatprep.subr.mxu0 0.0
        %1347 = vmatpush1.msra.mxu0 0.0
        %1348 = vmatprep.subr.mxu0 0.0
        %1349 = vmatpush1.msra.mxu0 0.0
        %1350 = vmatprep.subr.mxu0 0.0
        %1351 = vmatpush1.msra.mxu0 0.0
        %1352 = vmatprep.subr.mxu0 0.0
        %1353 = vmatpush1.msra.mxu0 0.0
        %1354 = vmatprep.subr.mxu0 0.0
        %1355 = vmatpush1.msra.mxu0 0.0
        %1356 = vmatprep.subr.mxu0 0.0
        %1357 = vmatpush1.msra.mxu0 0.0
        %1358 = vmatprep.subr.mxu0 0.0
        %1359 = vmatpush1.msra.mxu0 0.0
        %1360 = vmatprep.mubr.f32.mxu0 0.0
        %1361 = vmatmul.mubr.f32.gmra.mrb[0].mxu0 %v1153
        %v1362 = vpop.f32.mrb[0].mxu0
        %v1363 = vadd.f32 0.0, %v1362
        %v1364 = vpop.f32.mrb[0].mxu0
        %v1365 = vadd.f32 0.0, %v1364
        %1366 = vdwg.mxu0
        %v1367 = vadd.f32 %v1157, %v1292
        %v1368 = vadd.f32 %v1158, %v1294
        %v1369 = vadd.f32 %v1159, %v1363
        %v1370 = vadd.f32 %v1160, %v1365
        %v1371 = vmul.f32 %v1367, 0.5
        %v1372 = vmul.f32 %v1368, 0.5
        %v1373 = vmul.f32 %v1369, 0.5
        %v1374 = vtanh.pop %v1371
        %v1375 = vtanh.pop %v1372
        %v1376 = vtanh.pop %v1373
        %v1377 = vmul.f32 %v1374, 0.5
        %v1378 = vmul.f32 %v1375, 0.5
        %v1379 = vmul.f32 %v1376, 0.5
        %v1380 = vadd.f32 %v1377, 0.5
        %v1381 = vadd.f32 %v1378, 0.5
        %v1382 = vadd.f32 %v1379, 0.5
        %v1383 = vtanh.pop %v1370
        %v1384 = vmul.f32 %v1381, %v1151
        %v1385 = vmul.f32 %v1380, %v1383
        %v1386 = vadd.f32 %v1384, %v1385
        %v1387 = vtanh.pop %v1386
        %v1388 = vmul.f32 %v1382, %v1387
        %s1389 = scalar_lea.vmem %s388, 8 [#allocation14]
        %1390 = vst [vmem:[%s1389] sm:$0xff] %v1388
        %v1391 = vld [vmem:[#allocation4] sm:$0xff]
        %v1392 = vld [vmem:[#allocation4 + $0x8] sm:$0xff]
        %v1393 = vld [vmem:[#allocation4 + $0x10] sm:$0xff]
        %v1394 = vld [vmem:[#allocation4 + $0x18] sm:$0xff]
        %v1395 = vld [vmem:[#allocation13] sm:$0xff]
        %v1396 = vld [vmem:[#allocation13 + $0x8] sm:$0xff]
        %v1397 = vld [vmem:[#allocation13 + $0x10] sm:$0xff]
        %v1398 = vld [vmem:[#allocation13 + $0x18] sm:$0xff]
        %v1399 = vld [vmem:[#allocation13 + $0x20] sm:$0xff]
        %v1400 = vld [vmem:[#allocation13 + $0x28] sm:$0xff]
        %v1401 = vld [vmem:[#allocation13 + $0x30] sm:$0xff]
        %v1402 = vld [vmem:[#allocation13 + $0x38] sm:$0xff]
        %v1403 = vld [vmem:[#allocation13 + $0x40] sm:$0xff]
        %v1404 = vld [vmem:[#allocation13 + $0x48] sm:$0xff]
        %v1405 = vld [vmem:[#allocation13 + $0x50] sm:$0xff]
        %v1406 = vld [vmem:[#allocation13 + $0x58] sm:$0xff]
        %v1407 = vld [vmem:[#allocation13 + $0x60] sm:$0xff]
        %v1408 = vld [vmem:[#allocation13 + $0x68] sm:$0xff]
        %v1409 = vld [vmem:[#allocation13 + $0x70] sm:$0xff]
        %v1410 = vld [vmem:[#allocation13 + $0x78] sm:$0xff]
        %v1411 = vld [vmem:[#allocation13 + $0x80] sm:$0xff]
        %v1412 = vld [vmem:[#allocation13 + $0x88] sm:$0xff]
        %v1413 = vld [vmem:[#allocation13 + $0x90] sm:$0xff]
        %v1414 = vld [vmem:[#allocation13 + $0x98] sm:$0xff]
        %v1415 = vld [vmem:[#allocation13 + $0xa0] sm:$0xff]
        %v1416 = vld [vmem:[#allocation13 + $0xa8] sm:$0xff]
        %v1417 = vld [vmem:[#allocation13 + $0xb0] sm:$0xff]
        %v1418 = vld [vmem:[#allocation13 + $0xb8] sm:$0xff]
        %v1419 = vld [vmem:[#allocation13 + $0xc0] sm:$0xff]
        %v1420 = vld [vmem:[#allocation13 + $0xc8] sm:$0xff]
        %v1421 = vld [vmem:[#allocation13 + $0xd0] sm:$0xff]
        %v1422 = vld [vmem:[#allocation13 + $0xd8] sm:$0xff]
        %v1423 = vld [vmem:[#allocation13 + $0xe0] sm:$0xff]
        %v1424 = vld [vmem:[#allocation13 + $0xe8] sm:$0xff]
        %v1425 = vld [vmem:[#allocation13 + $0xf0] sm:$0xff]
        %v1426 = vld [vmem:[#allocation13 + $0xf8] sm:$0xff]
        %v1427 = vld [vmem:[#allocation13 + $0x100] sm:$0xff]
        %v1428 = vld [vmem:[#allocation13 + $0x108] sm:$0xff]
        %v1429 = vld [vmem:[#allocation13 + $0x110] sm:$0xff]
        %v1430 = vld [vmem:[#allocation13 + $0x118] sm:$0xff]
        %v1431 = vld [vmem:[#allocation13 + $0x120] sm:$0xff]
        %v1432 = vld [vmem:[#allocation13 + $0x128] sm:$0xff]
        %v1433 = vld [vmem:[#allocation13 + $0x130] sm:$0xff]
        %v1434 = vld [vmem:[#allocation13 + $0x138] sm:$0xff]
        %v1435 = vld [vmem:[#allocation13 + $0x140] sm:$0xff]
        %v1436 = vld [vmem:[#allocation13 + $0x148] sm:$0xff]
        %v1437 = vld [vmem:[#allocation13 + $0x150] sm:$0xff]
        %v1438 = vld [vmem:[#allocation13 + $0x158] sm:$0xff]
        %v1439 = vld [vmem:[#allocation13 + $0x160] sm:$0xff]
        %v1440 = vld [vmem:[#allocation13 + $0x168] sm:$0xff]
        %v1441 = vld [vmem:[#allocation13 + $0x170] sm:$0xff]
        %v1442 = vld [vmem:[#allocation13 + $0x178] sm:$0xff]
        %v1443 = vld [vmem:[#allocation13 + $0x180] sm:$0xff]
        %v1444 = vld [vmem:[#allocation13 + $0x188] sm:$0xff]
        %v1445 = vld [vmem:[#allocation13 + $0x190] sm:$0xff]
        %v1446 = vld [vmem:[#allocation13 + $0x198] sm:$0xff]
        %v1447 = vld [vmem:[#allocation13 + $0x1a0] sm:$0xff]
        %v1448 = vld [vmem:[#allocation13 + $0x1a8] sm:$0xff]
        %v1449 = vld [vmem:[#allocation13 + $0x1b0] sm:$0xff]
        %v1450 = vld [vmem:[#allocation13 + $0x1b8] sm:$0xff]
        %v1451 = vld [vmem:[#allocation13 + $0x1c0] sm:$0xff]
        %v1452 = vld [vmem:[#allocation13 + $0x1c8] sm:$0xff]
        %v1453 = vld [vmem:[#allocation13 + $0x1d0] sm:$0xff]
        %v1454 = vld [vmem:[#allocation13 + $0x1d8] sm:$0xff]
        %v1455 = vld [vmem:[#allocation13 + $0x1e0] sm:$0xff]
        %v1456 = vld [vmem:[#allocation13 + $0x1e8] sm:$0xff]
        %v1457 = vld [vmem:[#allocation13 + $0x1f0] sm:$0xff]
        %v1458 = vld [vmem:[#allocation13 + $0x1f8] sm:$0xff]
        %1459 = vmatprep.subr.mxu0 %v1396
        %1460 = vmatpush1.msra.mxu0 %v1395
        %1461 = vmatprep.subr.mxu0 %v1400
        %1462 = vmatpush1.msra.mxu0 %v1399
        %1463 = vmatprep.subr.mxu0 %v1404
        %1464 = vmatpush1.msra.mxu0 %v1403
        %1465 = vmatprep.subr.mxu0 %v1408
        %1466 = vmatpush1.msra.mxu0 %v1407
        %1467 = vmatprep.subr.mxu0 %v1412
        %1468 = vmatpush1.msra.mxu0 %v1411
        %1469 = vmatprep.subr.mxu0 %v1416
        %1470 = vmatpush1.msra.mxu0 %v1415
        %1471 = vmatprep.subr.mxu0 %v1420
        %1472 = vmatpush1.msra.mxu0 %v1419
        %1473 = vmatprep.subr.mxu0 %v1424
        %1474 = vmatpush1.msra.mxu0 %v1423
        %1475 = vmatprep.subr.mxu0 %v1428
        %1476 = vmatpush1.msra.mxu0 %v1427
        %1477 = vmatprep.subr.mxu0 %v1432
        %1478 = vmatpush1.msra.mxu0 %v1431
        %1479 = vmatprep.subr.mxu0 %v1436
        %1480 = vmatpush1.msra.mxu0 %v1435
        %1481 = vmatprep.subr.mxu0 %v1440
        %1482 = vmatpush1.msra.mxu0 %v1439
        %1483 = vmatprep.subr.mxu0 %v1444
        %1484 = vmatpush1.msra.mxu0 %v1443
        %1485 = vmatprep.subr.mxu0 %v1448
        %1486 = vmatpush1.msra.mxu0 %v1447
        %1487 = vmatprep.subr.mxu0 %v1452
        %1488 = vmatpush1.msra.mxu0 %v1451
        %1489 = vmatprep.subr.mxu0 %v1456
        %1490 = vmatpush1.msra.mxu0 %v1455
        %1491 = vmatprep.subr.mxu0 0.0
        %1492 = vmatpush1.msra.mxu0 0.0
        %1493 = vmatprep.subr.mxu0 0.0
        %1494 = vmatpush1.msra.mxu0 0.0
        %1495 = vmatprep.subr.mxu0 0.0
        %1496 = vmatpush1.msra.mxu0 0.0
        %1497 = vmatprep.subr.mxu0 0.0
        %1498 = vmatpush1.msra.mxu0 0.0
        %1499 = vmatprep.subr.mxu0 0.0
        %1500 = vmatpush1.msra.mxu0 0.0
        %1501 = vmatprep.subr.mxu0 0.0
        %1502 = vmatpush1.msra.mxu0 0.0
        %1503 = vmatprep.subr.mxu0 0.0
        %1504 = vmatpush1.msra.mxu0 0.0
        %1505 = vmatprep.subr.mxu0 0.0
        %1506 = vmatpush1.msra.mxu0 0.0
        %1507 = vmatprep.subr.mxu0 0.0
        %1508 = vmatpush1.msra.mxu0 0.0
        %1509 = vmatprep.subr.mxu0 0.0
        %1510 = vmatpush1.msra.mxu0 0.0
        %1511 = vmatprep.subr.mxu0 0.0
        %1512 = vmatpush1.msra.mxu0 0.0
        %1513 = vmatprep.subr.mxu0 0.0
        %1514 = vmatpush1.msra.mxu0 0.0
        %1515 = vmatprep.subr.mxu0 0.0
        %1516 = vmatpush1.msra.mxu0 0.0
        %1517 = vmatprep.subr.mxu0 0.0
        %1518 = vmatpush1.msra.mxu0 0.0
        %1519 = vmatprep.subr.mxu0 0.0
        %1520 = vmatpush1.msra.mxu0 0.0
        %1521 = vmatprep.subr.mxu0 0.0
        %1522 = vmatpush1.msra.mxu0 0.0
        %1523 = vmatprep.mubr.f32.mxu0 0.0
        %1524 = vmatmul.mubr.f32.gmra.mrb[0].mxu0 %v1388
        %v1525 = vpop.f32.mrb[0].mxu0
        %v1526 = vadd.f32 0.0, %v1525
        %v1527 = vpop.f32.mrb[0].mxu0
        %v1528 = vadd.f32 0.0, %v1527
        %1529 = vdwg.mxu0
        %1530 = vmatprep.subr.mxu0 %v1398
        %1531 = vmatpush1.msra.mxu0 %v1397
        %1532 = vmatprep.subr.mxu0 %v1402
        %1533 = vmatpush1.msra.mxu0 %v1401
        %1534 = vmatprep.subr.mxu0 %v1406
        %1535 = vmatpush1.msra.mxu0 %v1405
        %1536 = vmatprep.subr.mxu0 %v1410
        %1537 = vmatpush1.msra.mxu0 %v1409
        %1538 = vmatprep.subr.mxu0 %v1414
        %1539 = vmatpush1.msra.mxu0 %v1413
        %1540 = vmatprep.subr.mxu0 %v1418
        %1541 = vmatpush1.msra.mxu0 %v1417
        %1542 = vmatprep.subr.mxu0 %v1422
        %1543 = vmatpush1.msra.mxu0 %v1421
        %1544 = vmatprep.subr.mxu0 %v1426
        %1545 = vmatpush1.msra.mxu0 %v1425
        %1546 = vmatprep.subr.mxu0 %v1430
        %1547 = vmatpush1.msra.mxu0 %v1429
        %1548 = vmatprep.subr.mxu0 %v1434
        %1549 = vmatpush1.msra.mxu0 %v1433
        %1550 = vmatprep.subr.mxu0 %v1438
        %1551 = vmatpush1.msra.mxu0 %v1437
        %1552 = vmatprep.subr.mxu0 %v1442
        %1553 = vmatpush1.msra.mxu0 %v1441
        %1554 = vmatprep.subr.mxu0 %v1446
        %1555 = vmatpush1.msra.mxu0 %v1445
        %1556 = vmatprep.subr.mxu0 %v1450
        %1557 = vmatpush1.msra.mxu0 %v1449
        %1558 = vmatprep.subr.mxu0 %v1454
        %1559 = vmatpush1.msra.mxu0 %v1453
        %1560 = vmatprep.subr.mxu0 %v1458
        %1561 = vmatpush1.msra.mxu0 %v1457
        %1562 = vmatprep.subr.mxu0 0.0
        %1563 = vmatpush1.msra.mxu0 0.0
        %1564 = vmatprep.subr.mxu0 0.0
        %1565 = vmatpush1.msra.mxu0 0.0
        %1566 = vmatprep.subr.mxu0 0.0
        %1567 = vmatpush1.msra.mxu0 0.0
        %1568 = vmatprep.subr.mxu0 0.0
        %1569 = vmatpush1.msra.mxu0 0.0
        %1570 = vmatprep.subr.mxu0 0.0
        %1571 = vmatpush1.msra.mxu0 0.0
        %1572 = vmatprep.subr.mxu0 0.0
        %1573 = vmatpush1.msra.mxu0 0.0
        %1574 = vmatprep.subr.mxu0 0.0
        %1575 = vmatpush1.msra.mxu0 0.0
        %1576 = vmatprep.subr.mxu0 0.0
        %1577 = vmatpush1.msra.mxu0 0.0
        %1578 = vmatprep.subr.mxu0 0.0
        %1579 = vmatpush1.msra.mxu0 0.0
        %1580 = vmatprep.subr.mxu0 0.0
        %1581 = vmatpush1.msra.mxu0 0.0
        %1582 = vmatprep.subr.mxu0 0.0
        %1583 = vmatpush1.msra.mxu0 0.0
        %1584 = vmatprep.subr.mxu0 0.0
        %1585 = vmatpush1.msra.mxu0 0.0
        %1586 = vmatprep.subr.mxu0 0.0
        %1587 = vmatpush1.msra.mxu0 0.0
        %1588 = vmatprep.subr.mxu0 0.0
        %1589 = vmatpush1.msra.mxu0 0.0
        %1590 = vmatprep.subr.mxu0 0.0
        %1591 = vmatpush1.msra.mxu0 0.0
        %1592 = vmatprep.subr.mxu0 0.0
        %1593 = vmatpush1.msra.mxu0 0.0
        %1594 = vmatprep.mubr.f32.mxu0 0.0
        %1595 = vmatmul.mubr.f32.gmra.mrb[0].mxu0 %v1388
        %v1596 = vpop.f32.mrb[0].mxu0
        %v1597 = vadd.f32 0.0, %v1596
        %v1598 = vpop.f32.mrb[0].mxu0
        %v1599 = vadd.f32 0.0, %v1598
        %1600 = vdwg.mxu0
        %v1601 = vadd.f32 %v1391, %v1526
        %v1602 = vadd.f32 %v1392, %v1528
        %v1603 = vadd.f32 %v1393, %v1597
        %v1604 = vadd.f32 %v1394, %v1599
        %v1605 = vmul.f32 %v1601, 0.5
        %v1606 = vmul.f32 %v1602, 0.5
        %v1607 = vmul.f32 %v1603, 0.5
        %v1608 = vtanh.pop %v1605
        %v1609 = vtanh.pop %v1606
        %v1610 = vtanh.pop %v1607
        %v1611 = vmul.f32 %v1608, 0.5
        %v1612 = vmul.f32 %v1609, 0.5
        %v1613 = vmul.f32 %v1610, 0.5
        %v1614 = vadd.f32 %v1611, 0.5
        %v1615 = vadd.f32 %v1612, 0.5
        %v1616 = vadd.f32 %v1613, 0.5
        %v1617 = vtanh.pop %v1604
        %v1618 = vmul.f32 %v1615, %v1386
        %v1619 = vmul.f32 %v1614, %v1617
        %v1620 = vadd.f32 %v1618, %v1619
        %v1621 = vtanh.pop %v1620
        %v1622 = vmul.f32 %v1616, %v1621
        %1623 = vst [vmem:[%s388] sm:$0xff] %v1622
        %1624 = vst [vmem:[#allocation2] sm:$0xff] %v1622
        %1625 = vst [vmem:[#allocation3] sm:$0xff] %v1620
        %p1626 = scmp.eq.s32.totalorder %s33, 3
        // Predicated region
        $region69: #{tpu_custom_call.1} parent=43 // pred_check
          %p1627 = pneg %p1626
        $region70: #{tpu_custom_call.1} parent=43 // pred_check_branch
          %1629 = sbr.rel (%p1627) target = $region72
        $region71: #{tpu_custom_call.1} parent=43 // pred_region
          %1630 = vst [vmem:[#allocation15] sm:$0xff] %v1620
        $region72: #{tpu_custom_call.1} parent=43 // pred_fallthru
          _
        %s1631 = sand.u32 %s197, 1
        %s1632 = scalar_lea.sflag [#allocation7], %s1631
        %s1633 = sand.u32 %s197, 1
        %s1634 = smul.addr %s1633, 32
        %s1635 = scalar_lea.vmem [#allocation14], %s1634
        // Predicated region
        $region73: #{tpu_custom_call.1} parent=43 // pred_check
          %p1636 = pneg %p207
        $region74: #{tpu_custom_call.1} parent=43 // pred_check_branch
          %1638 = sbr.rel (%p1636) target = $region76
        $region75: #{tpu_custom_call.1} parent=43 // pred_region
          %s1639 = ssub.s32 3, %s33
          %s1640 = smul.u32 4, %s1639
          %s1642 = ssub.s32 512, 512
          %1643 = vsyncadd %s1632, %s1642
          %s1644 = sadd.s32 %s32, %s1640
          %s1645 = smul.addr %s1644, 128
          %s1646 = scalar_lea.hbm %s6, %s1645
          %s1647 = sshll.u32 %s1635, 4
          %s1648 = int_to_ptr.vmem [resolvable:$true] %s1647
          %1653 = dma.vmem_to_hbm [thread:$0]  %s1648, 512, %s1646, %s1632, 128, 128, 8
        $region76: #{tpu_custom_call.1} parent=43 // pred_fallthru
          _
        // Predicated region
        $region77: #{tpu_custom_call.1} parent=43 // pred_check
          %p1654 = pneg %p233
        $region78: #{tpu_custom_call.1} parent=43 // pred_check_branch
          %1656 = sbr.rel (%p1654) target = $region80
        $region79: #{tpu_custom_call.1} parent=43 // pred_region
          %s1658 = ssub.s32 128, 128
          %1659 = vsyncadd [#allocation16], %s1658
          %s1660 = smul.addr %s32, 128
          %s1661 = scalar_lea.hbm %s7, %s1660
          %s1663 = sshll.u32 [#allocation15], 4
          %s1664 = int_to_ptr.vmem [resolvable:$true] %s1663
          %1666 = dma.vmem_to_hbm [thread:$0]  %s1664, 128, %s1661, [#allocation16]
        $region80: #{tpu_custom_call.1} parent=43 // pred_fallthru
          _
        // Predicated region
        $region81: #{tpu_custom_call.1} parent=43 // pred_check
          %p1667 = pneg %p233
        $region82: #{tpu_custom_call.1} parent=43 // pred_check_branch
          %1669 = sbr.rel (%p1667) target = $region84
        $region83: #{tpu_custom_call.1} parent=43 // pred_region
          %1670 = dma.done [#allocation16], 128
        $region84: #{tpu_custom_call.1} parent=43 // pred_fallthru
          _
      $region44: #{tpu_custom_call.1} parent=5 // pred_fallthru
        _
      %p1671 = scmp.le.s32.totalorder 2, %s23
      // Predicated region
      $region85: #{tpu_custom_call.1} parent=5 // pred_check
        %p1672 = pneg %p1671
      $region86: #{tpu_custom_call.1} parent=5 // pred_check_branch
        %1674 = sbr.rel (%p1672) target = $region88
      $region87: #{tpu_custom_call.1} parent=5 // pred_region
        %s1675 = ssub.s32 %s23, 2
        // Predicated region
        $region89: #{tpu_custom_call.1} parent=87 // pred_check
          %p1676 = pneg %p213
        $region90: #{tpu_custom_call.1} parent=87 // pred_check_branch
          %1678 = sbr.rel (%p1676) target = $region92
        $region91: #{tpu_custom_call.1} parent=87 // pred_region
          %s1679 = sand.u32 %s198, 1
          %s1680 = scalar_lea.sflag [#allocation7], %s1679
          %s1681 = sand.u32 %s198, 1
          %s1682 = smul.addr %s1681, 32
          %s1683 = scalar_lea.vmem [#allocation14], %s1682
          %1684 = dma.done %s1680, 512
        $region92: #{tpu_custom_call.1} parent=87 // pred_fallthru
          _
      $region88: #{tpu_custom_call.1} parent=5 // pred_fallthru
        _
    $region6: #{tpu_custom_call.1} parent=1 // loop_footer
      %s27 = sadd.s32 1, %s23
    $region7: #{tpu_custom_call.1} parent=1 // loop_footer_branch
      %22 = sbr.rel target = $region3
    $region8: #{tpu_custom_call.1} parent=1 // loop_exit
      _
    %1685 = vsyncpa [#allocation6], 1
    %s1686 = scalar_lea.sflag [#allocation6], 1
    %1687 = vsyncpa %s1686, 1
    %1688 = vsyncpa [#allocation9], 1
    %1689 = vsyncpa [#allocation12], 1
    %1690 = vsyncpa [#allocation7], 1
    %s1691 = scalar_lea.sflag [#allocation7], 1
    %1692 = vsyncpa %s1691, 1
    %1693 = vsyncpa [#allocation16], 1

</llo_original>
